<compile_context>
chip_gen: v6e
topology: v6e:2x2x1
jax: 0.10.0
libtpu: 0.0.40
codegen_flags: <defaults>
</compile_context>

<pallas_src>
import functools

import jax
import jax.numpy as jnp
from jax.experimental import pallas as pl
from jax.experimental.pallas import tpu as pltpu

EPS = 1e-5  # nn.BatchNorm2d default eps


# -----------------------------------------------------------------------------
# In-kernel conv helper (shared by both conv kernels)
# -----------------------------------------------------------------------------
def _conv_taps(xb, w_ref, lout, wp, fuse_taps):
    """3x3 'same' conv on a row-haloed, column-padded, flattened bf16 slab.

    xb : (Cin, LINP) bf16 slab (one guard element at each flat end).
    fuse_taps=True  : w_ref is (Cout, 9*Cin); the 9 lane-shifted slices are
                      stacked along sublanes and one deep (K=9*Cin) MXU matmul
                      is issued (better MXU contraction-depth utilisation).
    fuse_taps=False : w_ref is (9, Cout, Cin); 9 accumulating matmuls.
    """
    if fuse_taps:
        pieces = [xb[:, kh * wp + kw: kh * wp + kw + lout]
                  for kh in range(3) for kw in range(3)]
        xcat = jnp.concatenate(pieces, axis=0)              # (9*Cin, LOUT)
        return jnp.dot(w_ref[...], xcat, preferred_element_type=jnp.float32)
    cout = w_ref.shape[1]
    acc = jnp.zeros((cout, lout), jnp.float32)
    for kh in range(3):
        for kw in range(3):
            xs = xb[:, kh * wp + kw: kh * wp + kw + lout]   # (Cin, LOUT)
            acc = acc + jnp.dot(w_ref[kh * 3 + kw], xs,
                                preferred_element_type=jnp.float32)
    return acc


# -----------------------------------------------------------------------------
# Kernels
# -----------------------------------------------------------------------------
def _conv1_kernel(x_ref, w_ref, cmask_ref, y_ref, ssum_ref, ssq_ref,
                  *, wp, fuse_taps):
    """Conv1 on one row-tile + per-tile BN1 partial statistics (f32)."""
    lout = y_ref.shape[2]
    xb = x_ref[0]                                            # (Cin, LINP) bf16
    acc = _conv_taps(xb, w_ref, lout, wp, fuse_taps)         # (Cout, LOUT) f32
    y = acc * cmask_ref[...]                                 # zero pad columns
    y_ref[0] = y.astype(y_ref.dtype)                         # bf16 store
    ssum_ref[0] = jnp.sum(y, axis=1, keepdims=True)
    ssq_ref[0] = jnp.sum(y * y, axis=1, keepdims=True)


def _conv2_kernel(y1_ref, w_ref, scale_ref, shift_ref, alpha_ref, hmask_ref,
                  cmask_ref, y_ref, ssum_ref, ssq_ref, *, wp, fuse_taps):
    """Fused BN1-apply + PReLU prologue, conv2, per-tile BN2 partial stats.

    y1_ref    : (1, Cin, LINP) bf16 haloed raw conv1 output.
    scale/shift: (Cin, 1) f32 precomputed BN1 per-channel affine.
    alpha_ref : (1,) f32 in SMEM (PReLU slope).
    hmask_ref : (1, 1, LINP) f32, 1.0 only at real image pixels (masks the
                row-halo / column-pad / guard positions AFTER scale/shift).
    """
    lout = y_ref.shape[2]
    t = y1_ref[0] * scale_ref[...] + shift_ref[...]          # (Cin, LINP) f32
    a = alpha_ref[0]
    t = jnp.where(t >= 0.0, t, a * t)                        # PReLU
    hb = (t * hmask_ref[0]).astype(jnp.bfloat16)             # re-zero padding
    acc = _conv_taps(hb, w_ref, lout, wp, fuse_taps)
    y = acc * cmask_ref[...]
    y_ref[0] = y.astype(y_ref.dtype)                         # bf16 store
    ssum_ref[0] = jnp.sum(y, axis=1, keepdims=True)
    ssq_ref[0] = jnp.sum(y * y, axis=1, keepdims=True)


def _bn_add_kernel(y_ref, id_ref, scale_ref, shift_ref, o_ref):
    """BN2 apply (precomputed scale/shift) + residual add, f32 math."""
    t = y_ref[0] * scale_ref[...] + shift_ref[...]
    o_ref[0] = (t + id_ref[0]).astype(o_ref.dtype)


def _cparams():
    # 48 MiB: above the v5e/v6e default scoped VMEM limit, headroom under
    # v7x's 64 MiB physical VMEM.  Tile axis is parallel (megacore / 2 TCs).
    return pltpu.CompilerParams(dimension_semantics=("parallel",),
                                vmem_limit_bytes=48 * 1024 * 1024)


# -----------------------------------------------------------------------------
# pallas_call wrappers
# -----------------------------------------------------------------------------
def _conv1(xt, wk, cmask, wp, fuse_taps):
    t_, cin, linp = xt.shape
    cout = wk.shape[0] if fuse_taps else wk.shape[1]
    lout = cmask.shape[1]
    kern = functools.partial(_conv1_kernel, wp=wp, fuse_taps=fuse_taps)
    return pl.pallas_call(
        kern,
        grid=(t_,),
        in_specs=[
            pl.BlockSpec((1, cin, linp), lambda i: (i, 0, 0)),
            pl.BlockSpec(wk.shape, lambda i: (0,) * wk.ndim),
            pl.BlockSpec((1, lout), lambda i: (0, 0)),
        ],
        out_specs=(
            pl.BlockSpec((1, cout, lout), lambda i: (i, 0, 0)),
            pl.BlockSpec((1, cout, 1), lambda i: (i, 0, 0)),
            pl.BlockSpec((1, cout, 1), lambda i: (i, 0, 0)),
        ),
        out_shape=(
            jax.ShapeDtypeStruct((t_, cout, lout), jnp.bfloat16),
            jax.ShapeDtypeStruct((t_, cout, 1), jnp.float32),
            jax.ShapeDtypeStruct((t_, cout, 1), jnp.float32),
        ),
        compiler_params=_cparams(),
    )(xt, wk, cmask)


def _conv2(y1t, wk, scale1, shift1, alpha, hmask, cmask, wp, fuse_taps):
    t_, cin, linp = y1t.shape
    cout = wk.shape[0] if fuse_taps else wk.shape[1]
    lout = cmask.shape[1]
    kern = functools.partial(_conv2_kernel, wp=wp, fuse_taps=fuse_taps)
    return pl.pallas_call(
        kern,
        grid=(t_,),
        in_specs=[
            pl.BlockSpec((1, cin, linp), lambda i: (i, 0, 0)),
            pl.BlockSpec(wk.shape, lambda i: (0,) * wk.ndim),
            pl.BlockSpec((cin, 1), lambda i: (0, 0)),
            pl.BlockSpec((cin, 1), lambda i: (0, 0)),
            pl.BlockSpec(memory_space=pltpu.MemorySpace.SMEM),
            pl.BlockSpec((1, 1, linp), lambda i: (i, 0, 0)),
            pl.BlockSpec((1, lout), lambda i: (0, 0)),
        ],
        out_specs=(
            pl.BlockSpec((1, cout, lout), lambda i: (i, 0, 0)),
            pl.BlockSpec((1, cout, 1), lambda i: (i, 0, 0)),
            pl.BlockSpec((1, cout, 1), lambda i: (i, 0, 0)),
        ),
        out_shape=(
            jax.ShapeDtypeStruct((t_, cout, lout), jnp.bfloat16),
            jax.ShapeDtypeStruct((t_, cout, 1), jnp.float32),
            jax.ShapeDtypeStruct((t_, cout, 1), jnp.float32),
        ),
        compiler_params=_cparams(),
    )(y1t, wk, scale1, shift1, alpha, hmask, cmask)


def _bn_add(y2, ident, scale, shift):
    t_, c, lout = y2.shape
    return pl.pallas_call(
        _bn_add_kernel,
        grid=(t_,),
        in_specs=[
            pl.BlockSpec((1, c, lout), lambda i: (i, 0, 0)),
            pl.BlockSpec((1, c, lout), lambda i: (i, 0, 0)),
            pl.BlockSpec((c, 1), lambda i: (0, 0)),
            pl.BlockSpec((c, 1), lambda i: (0, 0)),
        ],
        out_specs=pl.BlockSpec((1, c, lout), lambda i: (i, 0, 0)),
        out_shape=jax.ShapeDtypeStruct((t_, c, lout), jnp.float32),
        compiler_params=_cparams(),
    )(y2, ident, scale, shift)


# -----------------------------------------------------------------------------
# Layout helpers (plain-JAX glue)
# -----------------------------------------------------------------------------
def _halo_tiles(a, tile_rows):
    """(N, C, H, Wp) column-padded activation -> (N*J, C, LINP) row-haloed,
    flattened tiles, with one guard element at each end of the flat axis."""
    n, c, h, wp = a.shape
    j = h // tile_rows
    linp = (tile_rows + 2) * wp + 2
    ap = jnp.pad(a, ((0, 0), (0, 0), (1, 1), (0, 0)))          # zero pad rows
    flat = ap.reshape(n, c, (h + 2) * wp)
    flat = jnp.pad(flat, ((0, 0), (0, 0), (1, 1)))             # flat guards
    tiles = [flat[:, :, k * tile_rows * wp: k * tile_rows * wp + linp]
             for k in range(j)]
    return jnp.stack(tiles, axis=1).reshape(n * j, c, linp)


def _tile(a, tile_rows):
    """(N, C, H, Wp) -> (N*J, C, TH*Wp) output-grid tiles."""
    n, c, h, wp = a.shape
    j = h // tile_rows
    return (a.reshape(n, c, j, tile_rows, wp)
             .transpose(0, 2, 1, 3, 4)
             .reshape(n * j, c, tile_rows * wp))


def _untile(t, n, c, h, wp, tile_rows):
    j = h // tile_rows
    return (t.reshape(n, j, c, tile_rows, wp)
             .transpose(0, 2, 1, 3, 4)
             .reshape(n, c, h, wp))


def _col_mask(tile_rows, w):
    wp = w + 2
    row = jnp.zeros((wp,), jnp.float32).at[1:w + 1].set(1.0)
    return jnp.tile(row, tile_rows).reshape(1, tile_rows * wp)


def _halo_masks(j_tiles, th, h, w):
    """(J, 1, LINP) mask over the haloed slab: 1.0 only at real image pixels
    (valid row AND valid column); 0.0 at row-halo borders, pad cols, guards."""
    wp = w + 2
    linp = (th + 2) * wp + 2
    p = jnp.arange(linp)
    js = jnp.arange(j_tiles)[:, None]
    q = js * th * wp + p[None, :] - 1          # index into the padded flat image
    row = q // wp
    col = q % wp
    valid = ((p[None, :] >= 1) & (p[None, :] <= linp - 2)
             & (row >= 1) & (row <= h) & (col >= 1) & (col <= w))
    return valid.astype(jnp.float32)[:, None, :]


def _w_taps(w):
    """(Cout, Cin, 3, 3) OIHW -> (9, Cout, Cin) bf16, tap-major (kh, kw)."""
    cout, cin = w.shape[0], w.shape[1]
    return jnp.transpose(w, (2, 3, 0, 1)).reshape(9, cout, cin).astype(jnp.bfloat16)


def _w_packed(w):
    """(Cout, Cin, 3, 3) OIHW -> (Cout, 9*Cin) bf16, columns tap-major then Cin."""
    cout, cin = w.shape[0], w.shape[1]
    return jnp.transpose(w, (0, 2, 3, 1)).reshape(cout, 9 * cin).astype(jnp.bfloat16)


def _bn_scale_shift(ssum, ssq, gamma, beta, count):
    s = jnp.sum(ssum, axis=0)[:, 0]
    q = jnp.sum(ssq, axis=0)[:, 0]
    mean = s / count
    var = jnp.maximum(q / count - mean * mean, 0.0)   # biased (training) variance
    inv = 1.0 / jnp.sqrt(var + EPS)
    scale = gamma * inv
    shift = beta - mean * scale
    return (scale.reshape(-1, 1).astype(jnp.float32),
            shift.reshape(-1, 1).astype(jnp.float32))


def _pick_tile_rows(h, wp, c, target_lanes=16384,
                    vmem_tile_budget=12 * 1024 * 1024):
    """Largest divisor TH of H whose per-tile working set (roughly double
    buffered) fits a v7x-safe VMEM budget and a lane-extent target.  v5e/v6e
    have 2x the VMEM so this is conservative there."""
    best = 1
    for th in range(1, h + 1):
        if h % th:
            continue
        lout = th * wp
        linp = (th + 2) * wp + 2
        per_tile = (c * linp * 2          # bf16 haloed slab
                    + 9 * c * lout * 2    # stacked-tap operand (fused path)
                    + 2 * c * lout * 4    # f32 acc + prologue temp
                    + c * lout * 2        # bf16 output
                    + (linp + lout) * 4)  # masks
        if lout <= target_lanes and 2 * per_tile <= vmem_tile_budget:
            best = th
    return best


# -----------------------------------------------------------------------------
# Forward pass
# -----------------------------------------------------------------------------
def residual_conv_block(x, params, tile_rows=None):
    """Forward pass of _ResidualConvBlock.  x: (N, C, H, W) float32, NCHW."""
    x = x.astype(jnp.float32)
    n, c, h, w = x.shape
    wp = w + 2
    # TODO(synk): for large W, pad Wp up to a multiple of 128 so every store is
    # an unmasked lane-dense vst (biggest single lever on v5e's 1 store slot).
    th = _pick_tile_rows(h, wp, c) if tile_rows is None else int(tile_rows)
    if h % th != 0:
        raise ValueError("tile_rows must divide H")
    j = h // th
    count = float(n * h * w)
    # Fused single K=9*Cin matmul only when the sublane concat is bf16-tile
    # aligned; small channel counts keep the per-tap path.
    fuse = (c % 16 == 0)

    cmask = _col_mask(th, w)                               # (1, LOUT)
    hmask = _halo_masks(j, th, h, w)                       # (J, 1, LINP)
    hmask_t = jnp.tile(hmask, (n, 1, 1))                   # (T, 1, LINP)
    wk1 = _w_packed(params["w1"]) if fuse else _w_taps(params["w1"])
    wk2 = _w_packed(params["w2"]) if fuse else _w_taps(params["w2"])
    alpha = params["alpha"].reshape(1).astype(jnp.float32)

    # ---- stage 1: conv1 + BN1 partial statistics (output kept in bf16) ------
    x_cp = jnp.pad(x, ((0, 0), (0, 0), (0, 0), (1, 1)))    # (N,C,H,Wp) f32
    # TODO(synk): the overlapping row-halo gather below is an XLA-side copy; a
    # manual double-buffered pltpu.make_async_copy from a memory_space=pl.ANY
    # padded image would stream the windows straight from HBM and remove it.
    xt = _halo_tiles(x_cp.astype(jnp.bfloat16), th)        # (T,C,LINP) bf16
    y1, s1, q1 = _conv1(xt, wk1, cmask, wp, fuse)
    scale1, shift1 = _bn_scale_shift(s1, q1, params["gamma1"], params["beta1"],
                                     count)

    # ---- stage 2: BN1+PReLU fused into the conv2 prologue --------------------
    y1_img = _untile(y1, n, c, h, wp, th)                  # (N,C,H,Wp) bf16
    y1t = _halo_tiles(y1_img, th)                          # (T,C,LINP) bf16
    y2, s2, q2 = _conv2(y1t, wk2, scale1, shift1, alpha, hmask_t, cmask,
                        wp, fuse)
    scale2, shift2 = _bn_scale_shift(s2, q2, params["gamma2"], params["beta2"],
                                     count)

    # ---- stage 3: BN2 apply + residual add -----------------------------------
    ident = _tile(x_cp, th)                                # (T,C,LOUT) f32
    out_t = _bn_add(y2, ident, scale2, shift2)
    out = _untile(out_t, n, c, h, wp, th)                  # (N,C,H,Wp) f32
    return out[:, :, :, 1:w + 1]


# -----------------------------------------------------------------------------
# Pure-JAX reference mirroring the kernel numerics
# (bf16 MXU operands + bf16-stored intermediates, f32 accumulation/statistics)
# -----------------------------------------------------------------------------
def _reference(x, params):
    x32 = x.astype(jnp.float32)
    n, c, h, w = x.shape

    def conv3x3(a_bf16, wgt):
        ap = jnp.pad(a_bf16, ((0, 0), (0, 0), (1, 1), (1, 1)))
        acc = jnp.zeros((n, wgt.shape[0], h, w), jnp.float32)
        for kh in range(3):
            for kw in range(3):
                xs = ap[:, :, kh:kh + h, kw:kw + w]
                wk = wgt[:, :, kh, kw].astype(jnp.bfloat16)
                acc = acc + jnp.einsum("oi,nihw->nohw", wk, xs,
                                       preferred_element_type=jnp.float32)
        return acc

    def bn_scale_shift(yf, gamma, beta):
        mean = jnp.mean(yf, axis=(0, 2, 3))
        var = jnp.maximum(jnp.mean(yf * yf, axis=(0, 2, 3)) - mean * mean, 0.0)
        inv = 1.0 / jnp.sqrt(var + EPS)
        scale = gamma * inv
        shift = beta - mean * scale
        return scale.reshape(1, -1, 1, 1), shift.reshape(1, -1, 1, 1)

    y1f = conv3x3(x32.astype(jnp.bfloat16), params["w1"])
    sc1, sh1 = bn_scale_shift(y1f, params["gamma1"], params["beta1"])
    y1q = y1f.astype(jnp.bfloat16).astype(jnp.float32)   # kernel stores y1 in bf16
    t1 = y1q * sc1 + sh1
    a = params["alpha"][0]
    h1 = jnp.where(t1 >= 0.0, t1, a * t1)
    y2f = conv3x3(h1.astype(jnp.bfloat16), params["w2"])
    sc2, sh2 = bn_scale_shift(y2f, params["gamma2"], params["beta2"])
    y2q = y2f.astype(jnp.bfloat16).astype(jnp.float32)   # kernel stores y2 in bf16
    return y2q * sc2 + sh2 + x32


def init_params(key, channels):
    k1, k2, k3, k4, k5, k6 = jax.random.split(key, 6)
    cc = channels
    w1 = 0.1 * jax.random.normal(k1, (cc, cc, 3, 3), jnp.float32)   # OIHW
    w2 = 0.1 * jax.random.normal(k2, (cc, cc, 3, 3), jnp.float32)
    gamma1 = 1.0 + 0.1 * jax.random.normal(k3, (cc,), jnp.float32)
    beta1 = 0.1 * jax.random.normal(k4, (cc,), jnp.float32)
    gamma2 = 1.0 + 0.1 * jax.random.normal(k5, (cc,), jnp.float32)
    beta2 = 0.1 * jax.random.normal(k6, (cc,), jnp.float32)
    alpha = jnp.full((1,), 0.25, jnp.float32)   # nn.PReLU() default single param
    return dict(w1=w1, w2=w2, gamma1=gamma1, beta1=beta1,
                gamma2=gamma2, beta2=beta2, alpha=alpha)


if __name__ == "__main__":
    key = jax.random.PRNGKey(0)
    kx, kp, kx2, kp2 = jax.random.split(key, 4)

    fwd = jax.jit(residual_conv_block, static_argnames=("tile_rows",))

    # ---- Test 1: channels=4 (per-tap path), interior-halo tiling -------------
    n, cc, hh, ww = 2, 4, 16, 16
    x = jax.random.normal(kx, (n, cc, hh, ww), jnp.float32)
    params = init_params(kp, cc)
    out = jax.block_until_ready(fwd(x, params, tile_rows=8))   # 2 row-tiles/image
    ref = jax.block_until_ready(_reference(x, params))
    assert out.shape == (n, cc, hh, ww)
    assert jnp.allclose(out, ref, rtol=2e-3, atol=2e-3), "mismatch vs JAX reference"

    out2 = jax.block_until_ready(fwd(x, params))               # auto tile size
    assert jnp.allclose(out2, ref, rtol=2e-3, atol=2e-3), "mismatch vs JAX reference"

    # ---- Test 2: channels=16 -> fused single K=9*Cin MXU matmul path ---------
    n2, c2, h2, w2 = 1, 16, 8, 8
    x2 = jax.random.normal(kx2, (n2, c2, h2, w2), jnp.float32)
    params2 = init_params(kp2, c2)
    out3 = jax.block_until_ready(fwd(x2, params2, tile_rows=4))
    ref2 = jax.block_until_ready(_reference(x2, params2))
    assert jnp.allclose(out3, ref2, rtol=2e-3, atol=2e-3), "mismatch vs JAX reference"

    print("KERNEL_OK")
</pallas_src>

<mosaic_0001>
module attributes {stable_mosaic.version = 11 : i64} {
  func.func @_conv2_kernel(%arg0: i32, %arg1: memref<1x4x182xbf16, #tpu.memory_space<vmem>>, %arg2: memref<9x4x4xbf16, #tpu.memory_space<vmem>>, %arg3: memref<4x1xf32, #tpu.memory_space<vmem>>, %arg4: memref<4x1xf32, #tpu.memory_space<vmem>>, %arg5: memref<1xf32, #tpu.memory_space<smem>>, %arg6: memref<1x1x182xf32, #tpu.memory_space<vmem>>, %arg7: memref<1x144xf32, #tpu.memory_space<vmem>>, %arg8: memref<1x4x144xbf16, #tpu.memory_space<vmem>>, %arg9: memref<1x4x1xf32, #tpu.memory_space<vmem>>, %arg10: memref<1x4x1xf32, #tpu.memory_space<vmem>>) attributes {dimension_semantics = [#tpu.dimension_semantics<parallel>], iteration_bounds = array<i64: 4>, scalar_prefetch = 0 : i64, scratch_operands = 0 : i64, tpu.core_type = #tpu.core_type<tc>, window_params = [{transform_indices = @transform_0, window_bounds = array<i64: 1, 4, 182>}, {pipeline_mode = #tpu.pipeline_mode<synchronous>, transform_indices = @transform_1, window_bounds = array<i64: 9, 4, 4>}, {pipeline_mode = #tpu.pipeline_mode<synchronous>, transform_indices = @transform_2, window_bounds = array<i64: 4, 1>}, {pipeline_mode = #tpu.pipeline_mode<synchronous>, transform_indices = @transform_3, window_bounds = array<i64: 4, 1>}, {transform_indices = @transform_4, window_bounds = array<i64: 1>}, {transform_indices = @transform_5, window_bounds = array<i64: 1, 1, 182>}, {pipeline_mode = #tpu.pipeline_mode<synchronous>, transform_indices = @transform_6, window_bounds = array<i64: 1, 144>}, {transform_indices = @transform_7, window_bounds = array<i64: 1, 4, 144>}, {transform_indices = @transform_8, window_bounds = array<i64: 1, 4, 1>}, {transform_indices = @transform_9, window_bounds = array<i64: 1, 4, 1>}]} {
    %c0 = arith.constant 0 : index
    %c0_0 = arith.constant 0 : index
    %c0_1 = arith.constant 0 : index
    %0 = vector.load %arg1[%c0, %c0_0, %c0_1] : memref<1x4x182xbf16, #tpu.memory_space<vmem>>, vector<1x4x182xbf16>
    %1 = vector.shape_cast %0 : vector<1x4x182xbf16> to vector<4x182xbf16>
    %c0_2 = arith.constant 0 : index
    %c0_3 = arith.constant 0 : index
    %2 = vector.load %arg3[%c0_2, %c0_3] : memref<4x1xf32, #tpu.memory_space<vmem>>, vector<4x1xf32>
    %3 = arith.extf %1 : vector<4x182xbf16> to vector<4x182xf32>
    %4 = vector.broadcast %2 : vector<4x1xf32> to vector<4x182xf32>
    %5 = arith.mulf %3, %4 : vector<4x182xf32>
    %c0_4 = arith.constant 0 : index
    %c0_5 = arith.constant 0 : index
    %6 = vector.load %arg4[%c0_4, %c0_5] : memref<4x1xf32, #tpu.memory_space<vmem>>, vector<4x1xf32>
    %7 = vector.broadcast %6 : vector<4x1xf32> to vector<4x182xf32>
    %8 = arith.addf %5, %7 : vector<4x182xf32>
    %c0_6 = arith.constant 0 : index
    %9 = memref.load %arg5[%c0_6] : memref<1xf32, #tpu.memory_space<smem>>
    %cst = arith.constant 0.000000e+00 : f32
    %10 = vector.broadcast %cst : f32 to vector<4x182xf32>
    %11 = arith.cmpf oge, %8, %10 : vector<4x182xf32>
    %12 = vector.broadcast %9 : f32 to vector<4x182xf32>
    %13 = arith.mulf %12, %8 : vector<4x182xf32>
    %14 = arith.select %11, %8, %13 : vector<4x182xi1>, vector<4x182xf32>
    %c0_7 = arith.constant 0 : index
    %c0_8 = arith.constant 0 : index
    %c0_9 = arith.constant 0 : index
    %15 = vector.load %arg6[%c0_7, %c0_8, %c0_9] : memref<1x1x182xf32, #tpu.memory_space<vmem>>, vector<1x1x182xf32>
    %16 = vector.shape_cast %15 : vector<1x1x182xf32> to vector<1x182xf32>
    %17 = vector.broadcast %16 : vector<1x182xf32> to vector<4x182xf32>
    %18 = arith.mulf %14, %17 : vector<4x182xf32>
    %19 = arith.truncf %18 : vector<4x182xf32> to vector<4x182xbf16>
    %cst_10 = arith.constant 0.000000e+00 : f32
    %20 = vector.broadcast %cst_10 : f32 to vector<4x144xf32>
    %21 = vector.extract_strided_slice %19 {offsets = [0, 0], sizes = [4, 144], strides = [1, 1]} : vector<4x182xbf16> to vector<4x144xbf16>
    %c0_11 = arith.constant 0 : index
    %c0_12 = arith.constant 0 : index
    %c0_13 = arith.constant 0 : index
    %22 = vector.load %arg2[%c0_11, %c0_12, %c0_13] : memref<9x4x4xbf16, #tpu.memory_space<vmem>>, vector<1x4x4xbf16>
    %23 = vector.shape_cast %22 : vector<1x4x4xbf16> to vector<4x4xbf16>
    %cst_14 = arith.constant dense<0.000000e+00> : vector<4x144xf32>
    %24 = tpu.matmul %23, %21, %cst_14 {dimension_numbers = #tpu.dot_dimension_numbers<[1], [0], [0], [1], [0, 0, 1, 1], [], []>} : vector<4x4xbf16>, vector<4x144xbf16>, vector<4x144xf32> -> vector<4x144xf32>
    %25 = arith.addf %20, %24 : vector<4x144xf32>
    %26 = vector.extract_strided_slice %19 {offsets = [0, 1], sizes = [4, 144], strides = [1, 1]} : vector<4x182xbf16> to vector<4x144xbf16>
    %c1 = arith.constant 1 : index
    %c0_15 = arith.constant 0 : index
    %c0_16 = arith.constant 0 : index
    %27 = vector.load %arg2[%c1, %c0_15, %c0_16] : memref<9x4x4xbf16, #tpu.memory_space<vmem>>, vector<1x4x4xbf16>
    %28 = vector.shape_cast %27 : vector<1x4x4xbf16> to vector<4x4xbf16>
    %cst_17 = arith.constant dense<0.000000e+00> : vector<4x144xf32>
    %29 = tpu.matmul %28, %26, %cst_17 {dimension_numbers = #tpu.dot_dimension_numbers<[1], [0], [0], [1], [0, 0, 1, 1], [], []>} : vector<4x4xbf16>, vector<4x144xbf16>, vector<4x144xf32> -> vector<4x144xf32>
    %30 = arith.addf %25, %29 : vector<4x144xf32>
    %31 = vector.extract_strided_slice %19 {offsets = [0, 2], sizes = [4, 144], strides = [1, 1]} : vector<4x182xbf16> to vector<4x144xbf16>
    %c2 = arith.constant 2 : index
    %c0_18 = arith.constant 0 : index
    %c0_19 = arith.constant 0 : index
    %32 = vector.load %arg2[%c2, %c0_18, %c0_19] : memref<9x4x4xbf16, #tpu.memory_space<vmem>>, vector<1x4x4xbf16>
    %33 = vector.shape_cast %32 : vector<1x4x4xbf16> to vector<4x4xbf16>
    %cst_20 = arith.constant dense<0.000000e+00> : vector<4x144xf32>
    %34 = tpu.matmul %33, %31, %cst_20 {dimension_numbers = #tpu.dot_dimension_numbers<[1], [0], [0], [1], [0, 0, 1, 1], [], []>} : vector<4x4xbf16>, vector<4x144xbf16>, vector<4x144xf32> -> vector<4x144xf32>
    %35 = arith.addf %30, %34 : vector<4x144xf32>
    %36 = vector.extract_strided_slice %19 {offsets = [0, 18], sizes = [4, 144], strides = [1, 1]} : vector<4x182xbf16> to vector<4x144xbf16>
    %c3 = arith.constant 3 : index
    %c0_21 = arith.constant 0 : index
    %c0_22 = arith.constant 0 : index
    %37 = vector.load %arg2[%c3, %c0_21, %c0_22] : memref<9x4x4xbf16, #tpu.memory_space<vmem>>, vector<1x4x4xbf16>
    %38 = vector.shape_cast %37 : vector<1x4x4xbf16> to vector<4x4xbf16>
    %cst_23 = arith.constant dense<0.000000e+00> : vector<4x144xf32>
    %39 = tpu.matmul %38, %36, %cst_23 {dimension_numbers = #tpu.dot_dimension_numbers<[1], [0], [0], [1], [0, 0, 1, 1], [], []>} : vector<4x4xbf16>, vector<4x144xbf16>, vector<4x144xf32> -> vector<4x144xf32>
    %40 = arith.addf %35, %39 : vector<4x144xf32>
    %41 = vector.extract_strided_slice %19 {offsets = [0, 19], sizes = [4, 144], strides = [1, 1]} : vector<4x182xbf16> to vector<4x144xbf16>
    %c4 = arith.constant 4 : index
    %c0_24 = arith.constant 0 : index
    %c0_25 = arith.constant 0 : index
    %42 = vector.load %arg2[%c4, %c0_24, %c0_25] : memref<9x4x4xbf16, #tpu.memory_space<vmem>>, vector<1x4x4xbf16>
    %43 = vector.shape_cast %42 : vector<1x4x4xbf16> to vector<4x4xbf16>
    %cst_26 = arith.constant dense<0.000000e+00> : vector<4x144xf32>
    %44 = tpu.matmul %43, %41, %cst_26 {dimension_numbers = #tpu.dot_dimension_numbers<[1], [0], [0], [1], [0, 0, 1, 1], [], []>} : vector<4x4xbf16>, vector<4x144xbf16>, vector<4x144xf32> -> vector<4x144xf32>
    %45 = arith.addf %40, %44 : vector<4x144xf32>
    %46 = vector.extract_strided_slice %19 {offsets = [0, 20], sizes = [4, 144], strides = [1, 1]} : vector<4x182xbf16> to vector<4x144xbf16>
    %c5 = arith.constant 5 : index
    %c0_27 = arith.constant 0 : index
    %c0_28 = arith.constant 0 : index
    %47 = vector.load %arg2[%c5, %c0_27, %c0_28] : memref<9x4x4xbf16, #tpu.memory_space<vmem>>, vector<1x4x4xbf16>
    %48 = vector.shape_cast %47 : vector<1x4x4xbf16> to vector<4x4xbf16>
    %cst_29 = arith.constant dense<0.000000e+00> : vector<4x144xf32>
    %49 = tpu.matmul %48, %46, %cst_29 {dimension_numbers = #tpu.dot_dimension_numbers<[1], [0], [0], [1], [0, 0, 1, 1], [], []>} : vector<4x4xbf16>, vector<4x144xbf16>, vector<4x144xf32> -> vector<4x144xf32>
    %50 = arith.addf %45, %49 : vector<4x144xf32>
    %51 = vector.extract_strided_slice %19 {offsets = [0, 36], sizes = [4, 144], strides = [1, 1]} : vector<4x182xbf16> to vector<4x144xbf16>
    %c6 = arith.constant 6 : index
    %c0_30 = arith.constant 0 : index
    %c0_31 = arith.constant 0 : index
    %52 = vector.load %arg2[%c6, %c0_30, %c0_31] : memref<9x4x4xbf16, #tpu.memory_space<vmem>>, vector<1x4x4xbf16>
    %53 = vector.shape_cast %52 : vector<1x4x4xbf16> to vector<4x4xbf16>
    %cst_32 = arith.constant dense<0.000000e+00> : vector<4x144xf32>
    %54 = tpu.matmul %53, %51, %cst_32 {dimension_numbers = #tpu.dot_dimension_numbers<[1], [0], [0], [1], [0, 0, 1, 1], [], []>} : vector<4x4xbf16>, vector<4x144xbf16>, vector<4x144xf32> -> vector<4x144xf32>
    %55 = arith.addf %50, %54 : vector<4x144xf32>
    %56 = vector.extract_strided_slice %19 {offsets = [0, 37], sizes = [4, 144], strides = [1, 1]} : vector<4x182xbf16> to vector<4x144xbf16>
    %c7 = arith.constant 7 : index
    %c0_33 = arith.constant 0 : index
    %c0_34 = arith.constant 0 : index
    %57 = vector.load %arg2[%c7, %c0_33, %c0_34] : memref<9x4x4xbf16, #tpu.memory_space<vmem>>, vector<1x4x4xbf16>
    %58 = vector.shape_cast %57 : vector<1x4x4xbf16> to vector<4x4xbf16>
    %cst_35 = arith.constant dense<0.000000e+00> : vector<4x144xf32>
    %59 = tpu.matmul %58, %56, %cst_35 {dimension_numbers = #tpu.dot_dimension_numbers<[1], [0], [0], [1], [0, 0, 1, 1], [], []>} : vector<4x4xbf16>, vector<4x144xbf16>, vector<4x144xf32> -> vector<4x144xf32>
    %60 = arith.addf %55, %59 : vector<4x144xf32>
    %61 = vector.extract_strided_slice %19 {offsets = [0, 38], sizes = [4, 144], strides = [1, 1]} : vector<4x182xbf16> to vector<4x144xbf16>
    %c8 = arith.constant 8 : index
    %c0_36 = arith.constant 0 : index
    %c0_37 = arith.constant 0 : index
    %62 = vector.load %arg2[%c8, %c0_36, %c0_37] : memref<9x4x4xbf16, #tpu.memory_space<vmem>>, vector<1x4x4xbf16>
    %63 = vector.shape_cast %62 : vector<1x4x4xbf16> to vector<4x4xbf16>
    %cst_38 = arith.constant dense<0.000000e+00> : vector<4x144xf32>
    %64 = tpu.matmul %63, %61, %cst_38 {dimension_numbers = #tpu.dot_dimension_numbers<[1], [0], [0], [1], [0, 0, 1, 1], [], []>} : vector<4x4xbf16>, vector<4x144xbf16>, vector<4x144xf32> -> vector<4x144xf32>
    %65 = arith.addf %60, %64 : vector<4x144xf32>
    %c0_39 = arith.constant 0 : index
    %c0_40 = arith.constant 0 : index
    %66 = vector.load %arg7[%c0_39, %c0_40] : memref<1x144xf32, #tpu.memory_space<vmem>>, vector<1x144xf32>
    %67 = vector.broadcast %66 : vector<1x144xf32> to vector<4x144xf32>
    %68 = arith.mulf %65, %67 : vector<4x144xf32>
    %69 = arith.truncf %68 : vector<4x144xf32> to vector<4x144xbf16>
    %c0_41 = arith.constant 0 : index
    %c0_42 = arith.constant 0 : index
    %c0_43 = arith.constant 0 : index
    %70 = vector.load %arg8[%c0_41, %c0_42, %c0_43] : memref<1x4x144xbf16, #tpu.memory_space<vmem>>, vector<1x4x144xbf16>
    %71 = vector.shape_cast %70 : vector<1x4x144xbf16> to vector<4x144xbf16>
    %72 = vector.shape_cast %69 : vector<4x144xbf16> to vector<1x4x144xbf16>
    tpu.vector_store %arg8[%c0_41, %c0_42, %c0_43], %72 {strides = array<i32>} : memref<1x4x144xbf16, #tpu.memory_space<vmem>>, vector<1x4x144xbf16>,
    %cst_44 = arith.constant dense<0.000000e+00> : vector<4xf32>
    %73 = vector.multi_reduction <add>, %68, %cst_44 [1] : vector<4x144xf32> to vector<4xf32>
    %74 = vector.shape_cast %73 : vector<4xf32> to vector<4x1xf32>
    %c0_45 = arith.constant 0 : index
    %c0_46 = arith.constant 0 : index
    %c0_47 = arith.constant 0 : index
    %75 = vector.load %arg9[%c0_45, %c0_46, %c0_47] : memref<1x4x1xf32, #tpu.memory_space<vmem>>, vector<1x4x1xf32>
    %76 = vector.shape_cast %75 : vector<1x4x1xf32> to vector<4x1xf32>
    %77 = vector.shape_cast %74 : vector<4x1xf32> to vector<1x4x1xf32>
    tpu.vector_store %arg9[%c0_45, %c0_46, %c0_47], %77 {strides = array<i32>} : memref<1x4x1xf32, #tpu.memory_space<vmem>>, vector<1x4x1xf32>,
    %78 = arith.mulf %68, %68 : vector<4x144xf32>
    %cst_48 = arith.constant dense<0.000000e+00> : vector<4xf32>
    %79 = vector.multi_reduction <add>, %78, %cst_48 [1] : vector<4x144xf32> to vector<4xf32>
    %80 = vector.shape_cast %79 : vector<4xf32> to vector<4x1xf32>
    %c0_49 = arith.constant 0 : index
    %c0_50 = arith.constant 0 : index
    %c0_51 = arith.constant 0 : index
    %81 = vector.load %arg10[%c0_49, %c0_50, %c0_51] : memref<1x4x1xf32, #tpu.memory_space<vmem>>, vector<1x4x1xf32>
    %82 = vector.shape_cast %81 : vector<1x4x1xf32> to vector<4x1xf32>
    %83 = vector.shape_cast %80 : vector<4x1xf32> to vector<1x4x1xf32>
    tpu.vector_store %arg10[%c0_49, %c0_50, %c0_51], %83 {strides = array<i32>} : memref<1x4x1xf32, #tpu.memory_space<vmem>>, vector<1x4x1xf32>,
    return
  }
  func.func @transform_0(%arg0: i32) -> (i32, i32, i32) {
    %c0_i32 = arith.constant 0 : i32
    %c0_i32_0 = arith.constant 0 : i32
    %c0_i32_1 = arith.constant 0 : i32
    return %arg0, %c0_i32, %c0_i32_0 : i32, i32, i32
  }
  func.func @transform_1(%arg0: i32) -> (i32, i32, i32) {
    %c0_i32 = arith.constant 0 : i32
    %c0_i32_0 = arith.constant 0 : i32
    %c0_i32_1 = arith.constant 0 : i32
    %c0_i32_2 = arith.constant 0 : i32
    return %c0_i32, %c0_i32_0, %c0_i32_1 : i32, i32, i32
  }
  func.func @transform_2(%arg0: i32) -> (i32, i32) {
    %c0_i32 = arith.constant 0 : i32
    %c0_i32_0 = arith.constant 0 : i32
    %c0_i32_1 = arith.constant 0 : i32
    return %c0_i32, %c0_i32_0 : i32, i32
  }
  func.func @transform_3(%arg0: i32) -> (i32, i32) {
    %c0_i32 = arith.constant 0 : i32
    %c0_i32_0 = arith.constant 0 : i32
    %c0_i32_1 = arith.constant 0 : i32
    return %c0_i32, %c0_i32_0 : i32, i32
  }
  func.func @transform_4(%arg0: i32) -> i32 {
    %c0_i32 = arith.constant 0 : i32
    %c0_i32_0 = arith.constant 0 : i32
    return %c0_i32 : i32
  }
  func.func @transform_5(%arg0: i32) -> (i32, i32, i32) {
    %c0_i32 = arith.constant 0 : i32
    %c0_i32_0 = arith.constant 0 : i32
    %c0_i32_1 = arith.constant 0 : i32
    return %arg0, %c0_i32, %c0_i32_0 : i32, i32, i32
  }
  func.func @transform_6(%arg0: i32) -> (i32, i32) {
    %c0_i32 = arith.constant 0 : i32
    %c0_i32_0 = arith.constant 0 : i32
    %c0_i32_1 = arith.constant 0 : i32
    return %c0_i32, %c0_i32_0 : i32, i32
  }
  func.func @transform_7(%arg0: i32) -> (i32, i32, i32) {
    %c0_i32 = arith.constant 0 : i32
    %c0_i32_0 = arith.constant 0 : i32
    %c0_i32_1 = arith.constant 0 : i32
    return %arg0, %c0_i32, %c0_i32_0 : i32, i32, i32
  }
  func.func @transform_8(%arg0: i32) -> (i32, i32, i32) {
    %c0_i32 = arith.constant 0 : i32
    %c0_i32_0 = arith.constant 0 : i32
    %c0_i32_1 = arith.constant 0 : i32
    return %arg0, %c0_i32, %c0_i32_0 : i32, i32, i32
  }
  func.func @transform_9(%arg0: i32) -> (i32, i32, i32) {
    %c0_i32 = arith.constant 0 : i32
    %c0_i32_0 = arith.constant 0 : i32
    %c0_i32_1 = arith.constant 0 : i32
    return %arg0, %c0_i32, %c0_i32_0 : i32, i32, i32
  }
}

module attributes {stable_mosaic.version = 11 : i64} {
  func.func @_conv1_kernel(%arg0: i32, %arg1: memref<1x4x182xbf16, #tpu.memory_space<vmem>>, %arg2: memref<9x4x4xbf16, #tpu.memory_space<vmem>>, %arg3: memref<1x144xf32, #tpu.memory_space<vmem>>, %arg4: memref<1x4x144xbf16, #tpu.memory_space<vmem>>, %arg5: memref<1x4x1xf32, #tpu.memory_space<vmem>>, %arg6: memref<1x4x1xf32, #tpu.memory_space<vmem>>) attributes {dimension_semantics = [#tpu.dimension_semantics<parallel>], iteration_bounds = array<i64: 4>, scalar_prefetch = 0 : i64, scratch_operands = 0 : i64, tpu.core_type = #tpu.core_type<tc>, window_params = [{transform_indices = @transform_0, window_bounds = array<i64: 1, 4, 182>}, {pipeline_mode = #tpu.pipeline_mode<synchronous>, transform_indices = @transform_1, window_bounds = array<i64: 9, 4, 4>}, {pipeline_mode = #tpu.pipeline_mode<synchronous>, transform_indices = @transform_2, window_bounds = array<i64: 1, 144>}, {transform_indices = @transform_3, window_bounds = array<i64: 1, 4, 144>}, {transform_indices = @transform_4, window_bounds = array<i64: 1, 4, 1>}, {transform_indices = @transform_5, window_bounds = array<i64: 1, 4, 1>}]} {
    %c0 = arith.constant 0 : index
    %c0_0 = arith.constant 0 : index
    %c0_1 = arith.constant 0 : index
    %0 = vector.load %arg1[%c0, %c0_0, %c0_1] : memref<1x4x182xbf16, #tpu.memory_space<vmem>>, vector<1x4x182xbf16>
    %1 = vector.shape_cast %0 : vector<1x4x182xbf16> to vector<4x182xbf16>
    %cst = arith.constant 0.000000e+00 : f32
    %2 = vector.broadcast %cst : f32 to vector<4x144xf32>
    %3 = vector.extract_strided_slice %1 {offsets = [0, 0], sizes = [4, 144], strides = [1, 1]} : vector<4x182xbf16> to vector<4x144xbf16>
    %c0_2 = arith.constant 0 : index
    %c0_3 = arith.constant 0 : index
    %c0_4 = arith.constant 0 : index
    %4 = vector.load %arg2[%c0_2, %c0_3, %c0_4] : memref<9x4x4xbf16, #tpu.memory_space<vmem>>, vector<1x4x4xbf16>
    %5 = vector.shape_cast %4 : vector<1x4x4xbf16> to vector<4x4xbf16>
    %cst_5 = arith.constant dense<0.000000e+00> : vector<4x144xf32>
    %6 = tpu.matmul %5, %3, %cst_5 {dimension_numbers = #tpu.dot_dimension_numbers<[1], [0], [0], [1], [0, 0, 1, 1], [], []>} : vector<4x4xbf16>, vector<4x144xbf16>, vector<4x144xf32> -> vector<4x144xf32>
    %7 = arith.addf %2, %6 : vector<4x144xf32>
    %8 = vector.extract_strided_slice %1 {offsets = [0, 1], sizes = [4, 144], strides = [1, 1]} : vector<4x182xbf16> to vector<4x144xbf16>
    %c1 = arith.constant 1 : index
    %c0_6 = arith.constant 0 : index
    %c0_7 = arith.constant 0 : index
    %9 = vector.load %arg2[%c1, %c0_6, %c0_7] : memref<9x4x4xbf16, #tpu.memory_space<vmem>>, vector<1x4x4xbf16>
    %10 = vector.shape_cast %9 : vector<1x4x4xbf16> to vector<4x4xbf16>
    %cst_8 = arith.constant dense<0.000000e+00> : vector<4x144xf32>
    %11 = tpu.matmul %10, %8, %cst_8 {dimension_numbers = #tpu.dot_dimension_numbers<[1], [0], [0], [1], [0, 0, 1, 1], [], []>} : vector<4x4xbf16>, vector<4x144xbf16>, vector<4x144xf32> -> vector<4x144xf32>
    %12 = arith.addf %7, %11 : vector<4x144xf32>
    %13 = vector.extract_strided_slice %1 {offsets = [0, 2], sizes = [4, 144], strides = [1, 1]} : vector<4x182xbf16> to vector<4x144xbf16>
    %c2 = arith.constant 2 : index
    %c0_9 = arith.constant 0 : index
    %c0_10 = arith.constant 0 : index
    %14 = vector.load %arg2[%c2, %c0_9, %c0_10] : memref<9x4x4xbf16, #tpu.memory_space<vmem>>, vector<1x4x4xbf16>
    %15 = vector.shape_cast %14 : vector<1x4x4xbf16> to vector<4x4xbf16>
    %cst_11 = arith.constant dense<0.000000e+00> : vector<4x144xf32>
    %16 = tpu.matmul %15, %13, %cst_11 {dimension_numbers = #tpu.dot_dimension_numbers<[1], [0], [0], [1], [0, 0, 1, 1], [], []>} : vector<4x4xbf16>, vector<4x144xbf16>, vector<4x144xf32> -> vector<4x144xf32>
    %17 = arith.addf %12, %16 : vector<4x144xf32>
    %18 = vector.extract_strided_slice %1 {offsets = [0, 18], sizes = [4, 144], strides = [1, 1]} : vector<4x182xbf16> to vector<4x144xbf16>
    %c3 = arith.constant 3 : index
    %c0_12 = arith.constant 0 : index
    %c0_13 = arith.constant 0 : index
    %19 = vector.load %arg2[%c3, %c0_12, %c0_13] : memref<9x4x4xbf16, #tpu.memory_space<vmem>>, vector<1x4x4xbf16>
    %20 = vector.shape_cast %19 : vector<1x4x4xbf16> to vector<4x4xbf16>
    %cst_14 = arith.constant dense<0.000000e+00> : vector<4x144xf32>
    %21 = tpu.matmul %20, %18, %cst_14 {dimension_numbers = #tpu.dot_dimension_numbers<[1], [0], [0], [1], [0, 0, 1, 1], [], []>} : vector<4x4xbf16>, vector<4x144xbf16>, vector<4x144xf32> -> vector<4x144xf32>
    %22 = arith.addf %17, %21 : vector<4x144xf32>
    %23 = vector.extract_strided_slice %1 {offsets = [0, 19], sizes = [4, 144], strides = [1, 1]} : vector<4x182xbf16> to vector<4x144xbf16>
    %c4 = arith.constant 4 : index
    %c0_15 = arith.constant 0 : index
    %c0_16 = arith.constant 0 : index
    %24 = vector.load %arg2[%c4, %c0_15, %c0_16] : memref<9x4x4xbf16, #tpu.memory_space<vmem>>, vector<1x4x4xbf16>
    %25 = vector.shape_cast %24 : vector<1x4x4xbf16> to vector<4x4xbf16>
    %cst_17 = arith.constant dense<0.000000e+00> : vector<4x144xf32>
    %26 = tpu.matmul %25, %23, %cst_17 {dimension_numbers = #tpu.dot_dimension_numbers<[1], [0], [0], [1], [0, 0, 1, 1], [], []>} : vector<4x4xbf16>, vector<4x144xbf16>, vector<4x144xf32> -> vector<4x144xf32>
    %27 = arith.addf %22, %26 : vector<4x144xf32>
    %28 = vector.extract_strided_slice %1 {offsets = [0, 20], sizes = [4, 144], strides = [1, 1]} : vector<4x182xbf16> to vector<4x144xbf16>
    %c5 = arith.constant 5 : index
    %c0_18 = arith.constant 0 : index
    %c0_19 = arith.constant 0 : index
    %29 = vector.load %arg2[%c5, %c0_18, %c0_19] : memref<9x4x4xbf16, #tpu.memory_space<vmem>>, vector<1x4x4xbf16>
    %30 = vector.shape_cast %29 : vector<1x4x4xbf16> to vector<4x4xbf16>
    %cst_20 = arith.constant dense<0.000000e+00> : vector<4x144xf32>
    %31 = tpu.matmul %30, %28, %cst_20 {dimension_numbers = #tpu.dot_dimension_numbers<[1], [0], [0], [1], [0, 0, 1, 1], [], []>} : vector<4x4xbf16>, vector<4x144xbf16>, vector<4x144xf32> -> vector<4x144xf32>
    %32 = arith.addf %27, %31 : vector<4x144xf32>
    %33 = vector.extract_strided_slice %1 {offsets = [0, 36], sizes = [4, 144], strides = [1, 1]} : vector<4x182xbf16> to vector<4x144xbf16>
    %c6 = arith.constant 6 : index
    %c0_21 = arith.constant 0 : index
    %c0_22 = arith.constant 0 : index
    %34 = vector.load %arg2[%c6, %c0_21, %c0_22] : memref<9x4x4xbf16, #tpu.memory_space<vmem>>, vector<1x4x4xbf16>
    %35 = vector.shape_cast %34 : vector<1x4x4xbf16> to vector<4x4xbf16>
    %cst_23 = arith.constant dense<0.000000e+00> : vector<4x144xf32>
    %36 = tpu.matmul %35, %33, %cst_23 {dimension_numbers = #tpu.dot_dimension_numbers<[1], [0], [0], [1], [0, 0, 1, 1], [], []>} : vector<4x4xbf16>, vector<4x144xbf16>, vector<4x144xf32> -> vector<4x144xf32>
    %37 = arith.addf %32, %36 : vector<4x144xf32>
    %38 = vector.extract_strided_slice %1 {offsets = [0, 37], sizes = [4, 144], strides = [1, 1]} : vector<4x182xbf16> to vector<4x144xbf16>
    %c7 = arith.constant 7 : index
    %c0_24 = arith.constant 0 : index
    %c0_25 = arith.constant 0 : index
    %39 = vector.load %arg2[%c7, %c0_24, %c0_25] : memref<9x4x4xbf16, #tpu.memory_space<vmem>>, vector<1x4x4xbf16>
    %40 = vector.shape_cast %39 : vector<1x4x4xbf16> to vector<4x4xbf16>
    %cst_26 = arith.constant dense<0.000000e+00> : vector<4x144xf32>
    %41 = tpu.matmul %40, %38, %cst_26 {dimension_numbers = #tpu.dot_dimension_numbers<[1], [0], [0], [1], [0, 0, 1, 1], [], []>} : vector<4x4xbf16>, vector<4x144xbf16>, vector<4x144xf32> -> vector<4x144xf32>
    %42 = arith.addf %37, %41 : vector<4x144xf32>
    %43 = vector.extract_strided_slice %1 {offsets = [0, 38], sizes = [4, 144], strides = [1, 1]} : vector<4x182xbf16> to vector<4x144xbf16>
    %c8 = arith.constant 8 : index
    %c0_27 = arith.constant 0 : index
    %c0_28 = arith.constant 0 : index
    %44 = vector.load %arg2[%c8, %c0_27, %c0_28] : memref<9x4x4xbf16, #tpu.memory_space<vmem>>, vector<1x4x4xbf16>
    %45 = vector.shape_cast %44 : vector<1x4x4xbf16> to vector<4x4xbf16>
    %cst_29 = arith.constant dense<0.000000e+00> : vector<4x144xf32>
    %46 = tpu.matmul %45, %43, %cst_29 {dimension_numbers = #tpu.dot_dimension_numbers<[1], [0], [0], [1], [0, 0, 1, 1], [], []>} : vector<4x4xbf16>, vector<4x144xbf16>, vector<4x144xf32> -> vector<4x144xf32>
    %47 = arith.addf %42, %46 : vector<4x144xf32>
    %c0_30 = arith.constant 0 : index
    %c0_31 = arith.constant 0 : index
    %48 = vector.load %arg3[%c0_30, %c0_31] : memref<1x144xf32, #tpu.memory_space<vmem>>, vector<1x144xf32>
    %49 = vector.broadcast %48 : vector<1x144xf32> to vector<4x144xf32>
    %50 = arith.mulf %47, %49 : vector<4x144xf32>
    %51 = arith.truncf %50 : vector<4x144xf32> to vector<4x144xbf16>
    %c0_32 = arith.constant 0 : index
    %c0_33 = arith.constant 0 : index
    %c0_34 = arith.constant 0 : index
    %52 = vector.load %arg4[%c0_32, %c0_33, %c0_34] : memref<1x4x144xbf16, #tpu.memory_space<vmem>>, vector<1x4x144xbf16>
    %53 = vector.shape_cast %52 : vector<1x4x144xbf16> to vector<4x144xbf16>
    %54 = vector.shape_cast %51 : vector<4x144xbf16> to vector<1x4x144xbf16>
    tpu.vector_store %arg4[%c0_32, %c0_33, %c0_34], %54 {strides = array<i32>} : memref<1x4x144xbf16, #tpu.memory_space<vmem>>, vector<1x4x144xbf16>,
    %cst_35 = arith.constant dense<0.000000e+00> : vector<4xf32>
    %55 = vector.multi_reduction <add>, %50, %cst_35 [1] : vector<4x144xf32> to vector<4xf32>
    %56 = vector.shape_cast %55 : vector<4xf32> to vector<4x1xf32>
    %c0_36 = arith.constant 0 : index
    %c0_37 = arith.constant 0 : index
    %c0_38 = arith.constant 0 : index
    %57 = vector.load %arg5[%c0_36, %c0_37, %c0_38] : memref<1x4x1xf32, #tpu.memory_space<vmem>>, vector<1x4x1xf32>
    %58 = vector.shape_cast %57 : vector<1x4x1xf32> to vector<4x1xf32>
    %59 = vector.shape_cast %56 : vector<4x1xf32> to vector<1x4x1xf32>
    tpu.vector_store %arg5[%c0_36, %c0_37, %c0_38], %59 {strides = array<i32>} : memref<1x4x1xf32, #tpu.memory_space<vmem>>, vector<1x4x1xf32>,
    %60 = arith.mulf %50, %50 : vector<4x144xf32>
    %cst_39 = arith.constant dense<0.000000e+00> : vector<4xf32>
    %61 = vector.multi_reduction <add>, %60, %cst_39 [1] : vector<4x144xf32> to vector<4xf32>
    %62 = vector.shape_cast %61 : vector<4xf32> to vector<4x1xf32>
    %c0_40 = arith.constant 0 : index
    %c0_41 = arith.constant 0 : index
    %c0_42 = arith.constant 0 : index
    %63 = vector.load %arg6[%c0_40, %c0_41, %c0_42] : memref<1x4x1xf32, #tpu.memory_space<vmem>>, vector<1x4x1xf32>
    %64 = vector.shape_cast %63 : vector<1x4x1xf32> to vector<4x1xf32>
    %65 = vector.shape_cast %62 : vector<4x1xf32> to vector<1x4x1xf32>
    tpu.vector_store %arg6[%c0_40, %c0_41, %c0_42], %65 {strides = array<i32>} : memref<1x4x1xf32, #tpu.memory_space<vmem>>, vector<1x4x1xf32>,
    return
  }
  func.func @transform_0(%arg0: i32) -> (i32, i32, i32) {
    %c0_i32 = arith.constant 0 : i32
    %c0_i32_0 = arith.constant 0 : i32
    %c0_i32_1 = arith.constant 0 : i32
    return %arg0, %c0_i32, %c0_i32_0 : i32, i32, i32
  }
  func.func @transform_1(%arg0: i32) -> (i32, i32, i32) {
    %c0_i32 = arith.constant 0 : i32
    %c0_i32_0 = arith.constant 0 : i32
    %c0_i32_1 = arith.constant 0 : i32
    %c0_i32_2 = arith.constant 0 : i32
    return %c0_i32, %c0_i32_0, %c0_i32_1 : i32, i32, i32
  }
  func.func @transform_2(%arg0: i32) -> (i32, i32) {
    %c0_i32 = arith.constant 0 : i32
    %c0_i32_0 = arith.constant 0 : i32
    %c0_i32_1 = arith.constant 0 : i32
    return %c0_i32, %c0_i32_0 : i32, i32
  }
  func.func @transform_3(%arg0: i32) -> (i32, i32, i32) {
    %c0_i32 = arith.constant 0 : i32
    %c0_i32_0 = arith.constant 0 : i32
    %c0_i32_1 = arith.constant 0 : i32
    return %arg0, %c0_i32, %c0_i32_0 : i32, i32, i32
  }
  func.func @transform_4(%arg0: i32) -> (i32, i32, i32) {
    %c0_i32 = arith.constant 0 : i32
    %c0_i32_0 = arith.constant 0 : i32
    %c0_i32_1 = arith.constant 0 : i32
    return %arg0, %c0_i32, %c0_i32_0 : i32, i32, i32
  }
  func.func @transform_5(%arg0: i32) -> (i32, i32, i32) {
    %c0_i32 = arith.constant 0 : i32
    %c0_i32_0 = arith.constant 0 : i32
    %c0_i32_1 = arith.constant 0 : i32
    return %arg0, %c0_i32, %c0_i32_0 : i32, i32, i32
  }
}

module attributes {stable_mosaic.version = 11 : i64} {
  func.func @_bn_add_kernel(%arg0: i32, %arg1: memref<1x4x144xbf16, #tpu.memory_space<vmem>>, %arg2: memref<1x4x144xf32, #tpu.memory_space<vmem>>, %arg3: memref<4x1xf32, #tpu.memory_space<vmem>>, %arg4: memref<4x1xf32, #tpu.memory_space<vmem>>, %arg5: memref<1x4x144xf32, #tpu.memory_space<vmem>>) attributes {dimension_semantics = [#tpu.dimension_semantics<parallel>], iteration_bounds = array<i64: 4>, scalar_prefetch = 0 : i64, scratch_operands = 0 : i64, tpu.core_type = #tpu.core_type<tc>, window_params = [{transform_indices = @transform_0, window_bounds = array<i64: 1, 4, 144>}, {transform_indices = @transform_1, window_bounds = array<i64: 1, 4, 144>}, {pipeline_mode = #tpu.pipeline_mode<synchronous>, transform_indices = @transform_2, window_bounds = array<i64: 4, 1>}, {pipeline_mode = #tpu.pipeline_mode<synchronous>, transform_indices = @transform_3, window_bounds = array<i64: 4, 1>}, {transform_indices = @transform_4, window_bounds = array<i64: 1, 4, 144>}]} {
    %c0 = arith.constant 0 : index
    %c0_0 = arith.constant 0 : index
    %c0_1 = arith.constant 0 : index
    %0 = vector.load %arg1[%c0, %c0_0, %c0_1] : memref<1x4x144xbf16, #tpu.memory_space<vmem>>, vector<1x4x144xbf16>
    %1 = vector.shape_cast %0 : vector<1x4x144xbf16> to vector<4x144xbf16>
    %c0_2 = arith.constant 0 : index
    %c0_3 = arith.constant 0 : index
    %2 = vector.load %arg3[%c0_2, %c0_3] : memref<4x1xf32, #tpu.memory_space<vmem>>, vector<4x1xf32>
    %3 = arith.extf %1 : vector<4x144xbf16> to vector<4x144xf32>
    %4 = vector.broadcast %2 : vector<4x1xf32> to vector<4x144xf32>
    %5 = arith.mulf %3, %4 : vector<4x144xf32>
    %c0_4 = arith.constant 0 : index
    %c0_5 = arith.constant 0 : index
    %6 = vector.load %arg4[%c0_4, %c0_5] : memref<4x1xf32, #tpu.memory_space<vmem>>, vector<4x1xf32>
    %7 = vector.broadcast %6 : vector<4x1xf32> to vector<4x144xf32>
    %8 = arith.addf %5, %7 : vector<4x144xf32>
    %c0_6 = arith.constant 0 : index
    %c0_7 = arith.constant 0 : index
    %c0_8 = arith.constant 0 : index
    %9 = vector.load %arg2[%c0_6, %c0_7, %c0_8] : memref<1x4x144xf32, #tpu.memory_space<vmem>>, vector<1x4x144xf32>
    %10 = vector.shape_cast %9 : vector<1x4x144xf32> to vector<4x144xf32>
    %11 = arith.addf %8, %10 : vector<4x144xf32>
    %c0_9 = arith.constant 0 : index
    %c0_10 = arith.constant 0 : index
    %c0_11 = arith.constant 0 : index
    %12 = vector.load %arg5[%c0_9, %c0_10, %c0_11] : memref<1x4x144xf32, #tpu.memory_space<vmem>>, vector<1x4x144xf32>
    %13 = vector.shape_cast %12 : vector<1x4x144xf32> to vector<4x144xf32>
    %14 = vector.shape_cast %11 : vector<4x144xf32> to vector<1x4x144xf32>
    tpu.vector_store %arg5[%c0_9, %c0_10, %c0_11], %14 {strides = array<i32>} : memref<1x4x144xf32, #tpu.memory_space<vmem>>, vector<1x4x144xf32>,
    return
  }
  func.func @transform_0(%arg0: i32) -> (i32, i32, i32) {
    %c0_i32 = arith.constant 0 : i32
    %c0_i32_0 = arith.constant 0 : i32
    %c0_i32_1 = arith.constant 0 : i32
    return %arg0, %c0_i32, %c0_i32_0 : i32, i32, i32
  }
  func.func @transform_1(%arg0: i32) -> (i32, i32, i32) {
    %c0_i32 = arith.constant 0 : i32
    %c0_i32_0 = arith.constant 0 : i32
    %c0_i32_1 = arith.constant 0 : i32
    return %arg0, %c0_i32, %c0_i32_0 : i32, i32, i32
  }
  func.func @transform_2(%arg0: i32) -> (i32, i32) {
    %c0_i32 = arith.constant 0 : i32
    %c0_i32_0 = arith.constant 0 : i32
    %c0_i32_1 = arith.constant 0 : i32
    return %c0_i32, %c0_i32_0 : i32, i32
  }
  func.func @transform_3(%arg0: i32) -> (i32, i32) {
    %c0_i32 = arith.constant 0 : i32
    %c0_i32_0 = arith.constant 0 : i32
    %c0_i32_1 = arith.constant 0 : i32
    return %c0_i32, %c0_i32_0 : i32, i32
  }
  func.func @transform_4(%arg0: i32) -> (i32, i32, i32) {
    %c0_i32 = arith.constant 0 : i32
    %c0_i32_0 = arith.constant 0 : i32
    %c0_i32_1 = arith.constant 0 : i32
    return %arg0, %c0_i32, %c0_i32_0 : i32, i32, i32
  }
}

</mosaic_0001>

<llo_original>
// kernel: tile.12
$region0: #{tile.12}
  #allocation0 [shape = 's32[1]{0}', space=sflag, size = 0x4, scoped, tag = 'scoped memory for tile.12']
  %s0 = inlined_call_operand.vmem [shape: f32[18], index: 0, kind: input, shape index: {}]
  %s1 = inlined_call_operand.vmem [shape: f32[8,18], index: 1, kind: output, shape index: {}]
  // Predicated region
  $region2: #{tile.12} parent=0 // pred_check
    _
  $region3: #{tile.12} parent=0 // pred_check_branch
    %3 = sbr.rel (0) target = $region5
  $region4: #{tile.12} parent=0 // pred_region
    _
  $region5: #{tile.12} parent=0 // pred_fallthru
    _
  %v4 = vld [vmem:[%s0] ss:$0 sm:$0xff]
  %5 = vst [vmem:[%s1] sm:$0xff] %v4

// kernel: tile.13
$region0: #{tile.13}
  %s0 = inlined_call_operand.vmem [shape: f32[8,18], index: 0, kind: input, shape index: {}]
  %s1 = inlined_call_operand.vmem [shape: f32[1,144], index: 1, kind: output, shape index: {}]
  $region1: #{tile.13} parent=0
    #allocation0 [shape = 'u8[8192]{0}', space=vmem, size = 0x2000, scoped, tag = 'scoped mem for output reshape']
    %v2 = vld [vmem:[%s0] sm:$0x1]
    %vm3 = vcmask 146432
    %4 = vst.msk [vmem:[#allocation0] sm:$0x1] %vm3, %v2
    %s5 = scalar_lea.vmem %s0, 7
    %v6 = vld [vmem:[%s5] sm:$0x1]
    %s7 = scalar_lea.vmem %s0, 7
    %v8 = vld [vmem:[%s7] sm:$0x1]
    %vm9 = vcmask 15360
    %v10 = vsel %vm9, %v8, %v6
    %11 = vrot.lane.b32.xlu0 %v10, 126
    %v12 = vpop.permute.xlu0 %11
    %vm13 = vcmask 130048
    %s14 = scalar_lea.vmem [#allocation0], 8
    %15 = vst.msk [vmem:[%s14] sm:$0x1] %vm13, %v12
    %vm16 = vcmask 1048560
    %17 = vst.msk [vmem:[#allocation0] sm:$0x1] %vm16, %v12
    %s18 = scalar_lea.vmem %s0, 6
    %v19 = vld [vmem:[%s18] sm:$0x1]
    %20 = vrot.lane.b32.xlu0 %v19, 108
    %v21 = vpop.permute.xlu0 %20
    %vm22 = vcmask 1032032
    %23 = vst.msk [vmem:[#allocation0] sm:$0x1] %vm22, %v21
    %s24 = scalar_lea.vmem %s0, 5
    %v25 = vld [vmem:[%s24] sm:$0x1]
    %26 = vrot.lane.b32.xlu0 %v25, 90
    %v27 = vpop.permute.xlu0 %26
    %vm28 = vcmask 884432
    %29 = vst.msk [vmem:[#allocation0] sm:$0x1] %vm28, %v27
    %s30 = scalar_lea.vmem %s0, 4
    %v31 = vld [vmem:[%s30] sm:$0x1]
    %32 = vrot.lane.b32.xlu0 %v31, 72
    %v33 = vpop.permute.xlu0 %32
    %vm34 = vcmask 736832
    %35 = vst.msk [vmem:[#allocation0] sm:$0x1] %vm34, %v33
    %s36 = scalar_lea.vmem %s0, 3
    %v37 = vld [vmem:[%s36] sm:$0x1]
    %38 = vrot.lane.b32.xlu0 %v37, 54
    %v39 = vpop.permute.xlu0 %38
    %vm40 = vcmask 589232
    %41 = vst.msk [vmem:[#allocation0] sm:$0x1] %vm40, %v39
    %s42 = scalar_lea.vmem %s0, 2
    %v43 = vld [vmem:[%s42] sm:$0x1]
    %44 = vrot.lane.b32.xlu0 %v43, 36
    %v45 = vpop.permute.xlu0 %44
    %vm46 = vcmask 441632
    %47 = vst.msk [vmem:[#allocation0] sm:$0x1] %vm46, %v45
    %s48 = scalar_lea.vmem %s0, 1
    %v49 = vld [vmem:[%s48] sm:$0x1]
    %50 = vrot.lane.b32.xlu0 %v49, 18
    %v51 = vpop.permute.xlu0 %50
    %vm52 = vcmask 294032
    %53 = vst.msk [vmem:[#allocation0] sm:$0x1] %vm52, %v51
    %s55 = sshll.u32 1, 1
    %s56 = ssub.s32 %s55, 1
    %v58 = vld [vmem:[#allocation0] sm:%s56]
    %s59 = sshll.u32 1, 1
    %s60 = ssub.s32 %s59, 1
    %61 = vst [vmem:[%s1] sm:%s60] %v58
    %s62 = scalar_lea.vmem [#allocation0], 8
    %v63 = vld [vmem:[%s62] sm:%s56]
    %s64 = sshll.u32 1, 1
    %s65 = ssub.s32 %s64, 1
    %s66 = scalar_lea.vmem %s1, 1
    %67 = vst [vmem:[%s66] sm:%s65] %v63

// kernel: residual_conv_block.5
$region0: #{residual_conv_block.5}
  #allocation0 [shape = 'u32[]', space=smem, size = 0x4, offset = 0x4, fixed_abs, tag = 'smem constant byte address 0x4 - core index']
  #allocation1 [shape = 'u32[144,128]{1,0:T(1,128)}', space=vmem, size = 0x12000, scoped, tag = 'internal scratch']
  %s0 = inlined_call_operand.vmem [shape: bf16[4,4,144], index: 0, kind: input, shape index: {}]
  %s1 = inlined_call_operand.vmem [shape: f32[4,4,144], index: 1, kind: input, shape index: {}]
  %s2 = inlined_call_operand.vmem [shape: f32[4,1], index: 2, kind: input, shape index: {}]
  %s3 = inlined_call_operand.vmem [shape: f32[4,1], index: 3, kind: input, shape index: {}]
  %s4 = inlined_call_operand.vmem [shape: f32[4,4,144], index: 4, kind: output, shape index: {}]
  %s5 = sld [smem:[#allocation0]]
  $region49: #{residual_conv_block.5} parent=0
    _
  %s7 = ssub.s32 1, %s5
  %s8 = scalar_select 0, %s7, %s5
  loop: start=0, step=1, limit=6
  $region2: #{residual_conv_block.5} parent=0 // loop_pre_header
    _
  $region3: #{residual_conv_block.5} parent=0 // loop_header
    %s10 = sphi 0, %s14
    %p11 = scmp.ge.s32.totalorder %s10, 6
    %s20 = sphi 0, %s22
    %s23 = sphi 0, %s20
    %s24 = sphi 0, %s23
    %s40 = sphi 0, %s24
    %s46 = sphi 0, %s48
    %s49 = sphi 0, %s46
    %s50 = sphi 0, %s49
    %s66 = sphi 0, %s50
    %s70 = sphi 0, %s70
    %s72 = sphi 0, %s70
    %s73 = sphi 0, %s72
    %s87 = sphi 0, %s73
    %s91 = sphi 0, %s91
    %s93 = sphi 0, %s91
    %s94 = sphi 0, %s93
    %s108 = sphi 0, %s94
    %s114 = sphi 0, %s116
    %s117 = sphi 0, %s114
    %s118 = sphi 0, %s117
    %s134 = sphi 0, %s118
  $region4: #{residual_conv_block.5} parent=0 // loop_header_branch
    %13 = sbr.rel (%p11) target = $region8
  $region5: #{residual_conv_block.5} parent=0 // loop_body
    %s15 = ssub.s32 %s10, 1
    %s16 = ssub.s32 %s10, 2
    %s17 = sadd.s32 %s10, 1
    %s18 = ssub.s32 %s10, %s17
    %p19 = scmp.eq.s32.totalorder %s18, 0
    %s21 = sadd.s32 %s20, 1
    %s22 = scalar_select %p19, %s20, %s21
    %p25 = pneg %p19
    %p26 = scmp.eq.s32.totalorder %s10, 3
    %p27 = por %p25, %p26
    %p28 = scmp.ne.s32.totalorder %s20, %s23
    %p29 = scmp.eq.s32.totalorder %s10, 0
    %p30 = por %p28, %p29
    %p31 = scmp.ne.s32.totalorder %s20, %s23
    %p32 = scmp.eq.s32.totalorder %s15, 3
    %p33 = por %p31, %p32
    %p34 = scmp.ne.s32.totalorder %s23, %s24
    %p35 = scmp.eq.s32.totalorder %s15, 0
    %p36 = por %p34, %p35
    %p37 = scmp.ne.s32.totalorder %s23, %s24
    %p38 = scmp.eq.s32.totalorder %s16, 3
    %p39 = por %p37, %p38
    %p41 = scmp.ne.s32.totalorder %s24, %s40
    %p42 = scmp.eq.s32.totalorder %s16, 0
    %p43 = por %p41, %p42
    %s44 = ssub.s32 %s10, %s17
    %p45 = scmp.eq.s32.totalorder %s44, 0
    %s47 = sadd.s32 %s46, 1
    %s48 = scalar_select %p45, %s46, %s47
    %p51 = pneg %p45
    %p52 = scmp.eq.s32.totalorder %s10, 3
    %p53 = por %p51, %p52
    %p54 = scmp.ne.s32.totalorder %s46, %s49
    %p55 = scmp.eq.s32.totalorder %s10, 0
    %p56 = por %p54, %p55
    %p57 = scmp.ne.s32.totalorder %s46, %s49
    %p58 = scmp.eq.s32.totalorder %s15, 3
    %p59 = por %p57, %p58
    %p60 = scmp.ne.s32.totalorder %s49, %s50
    %p61 = scmp.eq.s32.totalorder %s15, 0
    %p62 = por %p60, %p61
    %p63 = scmp.ne.s32.totalorder %s49, %s50
    %p64 = scmp.eq.s32.totalorder %s16, 3
    %p65 = por %p63, %p64
    %p67 = scmp.ne.s32.totalorder %s50, %s66
    %p68 = scmp.eq.s32.totalorder %s16, 0
    %p69 = por %p67, %p68
    %s71 = sadd.s32 %s70, 1
    %p74 = scmp.eq.s32.totalorder %s10, 3
    %p75 = scmp.ne.s32.totalorder %s70, %s72
    %p76 = scmp.eq.s32.totalorder %s10, 0
    %p77 = por %p75, %p76
    %p78 = scmp.ne.s32.totalorder %s70, %s72
    %p79 = scmp.eq.s32.totalorder %s15, 3
    %p80 = por %p78, %p79
    %p81 = scmp.ne.s32.totalorder %s72, %s73
    %p82 = scmp.eq.s32.totalorder %s15, 0
    %p83 = por %p81, %p82
    %p84 = scmp.ne.s32.totalorder %s72, %s73
    %p85 = scmp.eq.s32.totalorder %s16, 3
    %p86 = por %p84, %p85
    %p88 = scmp.ne.s32.totalorder %s73, %s87
    %p89 = scmp.eq.s32.totalorder %s16, 0
    %p90 = por %p88, %p89
    %s92 = sadd.s32 %s91, 1
    %p95 = scmp.eq.s32.totalorder %s10, 3
    %p96 = scmp.ne.s32.totalorder %s91, %s93
    %p97 = scmp.eq.s32.totalorder %s10, 0
    %p98 = por %p96, %p97
    %p99 = scmp.ne.s32.totalorder %s91, %s93
    %p100 = scmp.eq.s32.totalorder %s15, 3
    %p101 = por %p99, %p100
    %p102 = scmp.ne.s32.totalorder %s93, %s94
    %p103 = scmp.eq.s32.totalorder %s15, 0
    %p104 = por %p102, %p103
    %p105 = scmp.ne.s32.totalorder %s93, %s94
    %p106 = scmp.eq.s32.totalorder %s16, 3
    %p107 = por %p105, %p106
    %p109 = scmp.ne.s32.totalorder %s94, %s108
    %p110 = scmp.eq.s32.totalorder %s16, 0
    %p111 = por %p109, %p110
    %s112 = ssub.s32 %s10, %s17
    %p113 = scmp.eq.s32.totalorder %s112, 0
    %s115 = sadd.s32 %s114, 1
    %s116 = scalar_select %p113, %s114, %s115
    %p119 = pneg %p113
    %p120 = scmp.eq.s32.totalorder %s10, 3
    %p121 = por %p119, %p120
    %p122 = scmp.ne.s32.totalorder %s114, %s117
    %p123 = scmp.eq.s32.totalorder %s10, 0
    %p124 = por %p122, %p123
    %p125 = scmp.ne.s32.totalorder %s114, %s117
    %p126 = scmp.eq.s32.totalorder %s15, 3
    %p127 = por %p125, %p126
    %p128 = scmp.ne.s32.totalorder %s117, %s118
    %p129 = scmp.eq.s32.totalorder %s15, 0
    %p130 = por %p128, %p129
    %p131 = scmp.ne.s32.totalorder %s117, %s118
    %p132 = scmp.eq.s32.totalorder %s16, 3
    %p133 = por %p131, %p132
    %p135 = scmp.ne.s32.totalorder %s118, %s134
    %p136 = scmp.eq.s32.totalorder %s16, 0
    %p137 = por %p135, %p136
    %p138 = scmp.le.s32.totalorder 1, %s10
    %p139 = scmp.lt.s32.totalorder %s10, 5
    %p140 = pnand %p138, %p139
    %p141 = pneg %p140
    // Predicated region
    $region9: #{residual_conv_block.5} parent=5 // pred_check
      _
    $region10: #{residual_conv_block.5} parent=5 // pred_check_branch
      %143 = sbr.rel (%p140) target = $region12
    $region11: #{residual_conv_block.5} parent=5 // pred_region
      %s144 = ssub.s32 %s10, 1
      // Predicated region
      $region13: #{residual_conv_block.5} parent=11 // pred_check
        %p145 = pneg %p83
      $region14: #{residual_conv_block.5} parent=11 // pred_check_branch
        %147 = sbr.rel (%p145) target = $region16
      $region15: #{residual_conv_block.5} parent=11 // pred_region
        _
      $region16: #{residual_conv_block.5} parent=11 // pred_fallthru
        _
      // Predicated region
      $region17: #{residual_conv_block.5} parent=11 // pred_check
        %p148 = pneg %p104
      $region18: #{residual_conv_block.5} parent=11 // pred_check_branch
        %150 = sbr.rel (%p148) target = $region20
      $region19: #{residual_conv_block.5} parent=11 // pred_region
        _
      $region20: #{residual_conv_block.5} parent=11 // pred_fallthru
        _
    $region12: #{residual_conv_block.5} parent=5 // pred_fallthru
      _
    %p151 = scmp.lt.s32.totalorder %s10, 4
    // Predicated region
    $region21: #{residual_conv_block.5} parent=5 // pred_check
      %p152 = pneg %p151
    $region22: #{residual_conv_block.5} parent=5 // pred_check_branch
      %154 = sbr.rel (%p152) target = $region24
    $region23: #{residual_conv_block.5} parent=5 // pred_region
      // Predicated region
      $region25: #{residual_conv_block.5} parent=23 // pred_check
        %p155 = pneg %p30
      $region26: #{residual_conv_block.5} parent=23 // pred_check_branch
        %157 = sbr.rel (%p155) target = $region28
      $region27: #{residual_conv_block.5} parent=23 // pred_region
        %p158 = scmp.lt.s32.totalorder %s10, 3
        %s159 = scalar_select %p158, %s10, 3
        %s160 = smul.addr %s159, 2
        %s161 = smul.addr %s160, 2
        %s162 = scalar_lea.vmem %s0, %s161
      $region28: #{residual_conv_block.5} parent=23 // pred_fallthru
        _
      // Predicated region
      $region29: #{residual_conv_block.5} parent=23 // pred_check
        %p163 = pneg %p56
      $region30: #{residual_conv_block.5} parent=23 // pred_check_branch
        %165 = sbr.rel (%p163) target = $region32
      $region31: #{residual_conv_block.5} parent=23 // pred_region
        %p166 = scmp.lt.s32.totalorder %s10, 3
        %s167 = scalar_select %p166, %s10, 3
        %s168 = smul.addr %s167, 2
        %s169 = smul.addr %s168, 4
        %s170 = scalar_lea.vmem %s1, %s169
      $region32: #{residual_conv_block.5} parent=23 // pred_fallthru
        _
    $region24: #{residual_conv_block.5} parent=5 // pred_fallthru
      _
    %p171 = scmp.le.s32.totalorder 1, %s10
    %p172 = scmp.lt.s32.totalorder %s10, 5
    %p173 = pnand %p171, %p172
    %p174 = pneg %p173
    // Predicated region
    $region33: #{residual_conv_block.5} parent=5 // pred_check
      _
    $region34: #{residual_conv_block.5} parent=5 // pred_check_branch
      %176 = sbr.rel (%p173) target = $region36
    $region35: #{residual_conv_block.5} parent=5 // pred_region
      %s177 = ssub.s32 %s10, 1
      %p178 = scmp.lt.s32.totalorder %s15, 3
      %s179 = scalar_select %p178, %s15, 3
      %s180 = smul.addr %s179, 2
      %s181 = smul.addr %s180, 2
      %s182 = scalar_lea.vmem %s0, %s181
      %p183 = pneg %p36
      %p184 = pneg %p33
      %p185 = scmp.lt.s32.totalorder %s15, 3
      %s186 = scalar_select %p185, %s15, 3
      %s187 = smul.addr %s186, 2
      %s188 = smul.addr %s187, 4
      %s189 = scalar_lea.vmem %s1, %s188
      %p190 = pneg %p62
      %p191 = pneg %p59
      %p192 = pneg %p83
      %p193 = pneg %p80
      %p194 = pneg %p104
      %p195 = pneg %p101
      %p196 = pneg %p130
      %p197 = pneg %p127
      %p198 = scmp.lt.s32.totalorder %s15, 3
      %s199 = scalar_select %p198, %s15, 3
      %s200 = smul.addr %s199, 2
      %s201 = smul.addr %s200, 4
      %s202 = scalar_lea.vmem %s4, %s201
      %p203 = scmp.lt.s32.totalorder %s15, 3
      %s204 = scalar_select %p203, %s15, 3
      %s205 = smul.addr %s204, 2
      %s206 = smul.addr %s205, 2
      %s207 = scalar_lea.vmem %s0, %s206
      %p208 = scmp.lt.s32.totalorder %s15, 3
      %s209 = scalar_select %p208, %s15, 3
      %s210 = smul.addr %s209, 2
      %s211 = smul.addr %s210, 4
      %s212 = scalar_lea.vmem %s1, %s211
      %p213 = scmp.lt.s32.totalorder %s15, 3
      %s214 = scalar_select %p213, %s15, 3
      %s215 = smul.addr %s214, 2
      %s216 = smul.addr %s215, 4
      %s217 = scalar_lea.vmem %s4, %s216
      %v218 = vld [vmem:[%s207] sm:$0xf]
      %v219 = vld [vmem:[%s2] sm:$0xf]
      %v220 = vunpack.c.l.bf16 %v218
      %222 = vset.pattern.permute.xlu0 0
      %223 = vperm.xlu0 %222, %v219
      %v224 = vpop.permute.xlu0 %223
      %v226 = vunpack.c.l.s4 839922192
      %v227 = vunpack.c.0.s8 %v226
      %v228 = vlaneseq
      %v229 = vshrl.u32 %v228, 7
      %v230 = vsub.s32 %v227, %v229
      %v231 = vrot.slane %v224, %v230
      %v233 = vmul.f32 %v220, %v231
      %v234 = vld [vmem:[%s3] sm:$0xf]
      %236 = vset.pattern.permute.xlu0 0
      %237 = vperm.xlu0 %236, %v234
      %v238 = vpop.permute.xlu0 %237
      %v240 = vunpack.c.l.s4 839922192
      %v241 = vunpack.c.0.s8 %v240
      %v242 = vlaneseq
      %v243 = vshrl.u32 %v242, 7
      %v244 = vsub.s32 %v241, %v243
      %v245 = vrot.slane %v238, %v244
      %v247 = vadd.f32 %v233, %v245
      %v248 = vld [vmem:[%s212] sm:$0xff]
      %v249 = vadd.f32 %v247, %v248
      %vm250 = vcmask 1043456
      %vm251 = vcmask 130052
      %vm252 = vmor %vm251, %vm250
      %253 = vst.msk [vmem:[%s217] sm:$0xff] %vm252, %v249
      %p254 = scmp.lt.s32.totalorder %s15, 3
      %s255 = scalar_select %p254, %s15, 3
      %s256 = smul.addr %s255, 2
      %s257 = smul.addr %s256, 4
      %s258 = scalar_lea.vmem %s4, %s257
      // Predicated region
      $region37: #{residual_conv_block.5} parent=35 // pred_check
        %p259 = pneg %p127
      $region38: #{residual_conv_block.5} parent=35 // pred_check_branch
        %261 = sbr.rel (%p259) target = $region40
      $region39: #{residual_conv_block.5} parent=35 // pred_region
        _
      $region40: #{residual_conv_block.5} parent=35 // pred_fallthru
        _
    $region36: #{residual_conv_block.5} parent=5 // pred_fallthru
      _
    %p262 = scmp.le.s32.totalorder 2, %s10
    // Predicated region
    $region41: #{residual_conv_block.5} parent=5 // pred_check
      %p263 = pneg %p262
    $region42: #{residual_conv_block.5} parent=5 // pred_check_branch
      %265 = sbr.rel (%p263) target = $region44
    $region43: #{residual_conv_block.5} parent=5 // pred_region
      %s266 = ssub.s32 %s10, 2
      // Predicated region
      $region45: #{residual_conv_block.5} parent=43 // pred_check
        %p267 = pneg %p133
      $region46: #{residual_conv_block.5} parent=43 // pred_check_branch
        %269 = sbr.rel (%p267) target = $region48
      $region47: #{residual_conv_block.5} parent=43 // pred_region
        %p270 = scmp.lt.s32.totalorder %s16, 3
        %s271 = scalar_select %p270, %s16, 3
        %s272 = smul.addr %s271, 2
        %s273 = smul.addr %s272, 4
        %s274 = scalar_lea.vmem %s4, %s273
      $region48: #{residual_conv_block.5} parent=43 // pred_fallthru
        _
    $region44: #{residual_conv_block.5} parent=5 // pred_fallthru
      _
  $region6: #{residual_conv_block.5} parent=0 // loop_footer
    %s14 = sadd.s32 1, %s10
  $region7: #{residual_conv_block.5} parent=0 // loop_footer_branch
    %9 = sbr.rel target = $region3
  $region8: #{residual_conv_block.5} parent=0 // loop_exit
    _

// kernel: residual_conv_block.4
$region0: #{residual_conv_block.4}
  #allocation0 [shape = 'u32[]', space=smem, size = 0x4, offset = 0x4, fixed_abs, tag = 'smem constant byte address 0x4 - core index']
  #allocation1 [shape = 'u32[144,128]{1,0:T(1,128)}', space=vmem, size = 0x12000, scoped, tag = 'internal scratch']
  #allocation2 [shape = 'f32[1]{0:T(128)S(6)}', space=smem, size = 0x200, scoped, tag = 'scoped memory for residual_conv_block.4']
  %s0 = inlined_call_operand.vmem [shape: bf16[4,4,182], index: 0, kind: input, shape index: {}]
  %s1 = inlined_call_operand.vmem [shape: bf16[9,4,4], index: 1, kind: input, shape index: {}]
  %s2 = inlined_call_operand.vmem [shape: f32[4,1], index: 2, kind: input, shape index: {}]
  %s3 = inlined_call_operand.vmem [shape: f32[4,1], index: 3, kind: input, shape index: {}]
  %s4 = inlined_call_operand.<no memory space> [shape: f32[1], index: 4, kind: input, shape index: {}]
  %s5 = inlined_call_operand.vmem [shape: f32[4,1,182], index: 5, kind: input, shape index: {}]
  %s6 = inlined_call_operand.vmem [shape: f32[1,144], index: 6, kind: input, shape index: {}]
  %s7 = inlined_call_operand.vmem [shape: bf16[4,4,144], index: 7, kind: output, shape index: {0}]
  %s8 = inlined_call_operand.vmem [shape: f32[4,4,1], index: 8, kind: output, shape index: {1}]
  %s9 = inlined_call_operand.vmem [shape: f32[4,4,1], index: 9, kind: output, shape index: {2}]
  %10 = xla_tuple %s7, %s8, %s9
  %s11 = sld [smem:[#allocation0]]
  $region77: #{residual_conv_block.4} parent=0
    _
  %s13 = ssub.s32 1, %s11
  %s14 = scalar_select 0, %s13, %s11
  %15 = sst [smem:[#allocation2]] %s4
  loop: start=0, step=1, limit=6
  $region2: #{residual_conv_block.4} parent=0 // loop_pre_header
    _
  $region3: #{residual_conv_block.4} parent=0 // loop_header
    %s17 = sphi 0, %s21
    %p18 = scmp.ge.s32.totalorder %s17, 6
    %s27 = sphi 0, %s29
    %s30 = sphi 0, %s27
    %s31 = sphi 0, %s30
    %s47 = sphi 0, %s31
    %s51 = sphi 0, %s51
    %s53 = sphi 0, %s51
    %s54 = sphi 0, %s53
    %s68 = sphi 0, %s54
    %s72 = sphi 0, %s72
    %s74 = sphi 0, %s72
    %s75 = sphi 0, %s74
    %s89 = sphi 0, %s75
    %s93 = sphi 0, %s93
    %s95 = sphi 0, %s93
    %s96 = sphi 0, %s95
    %s110 = sphi 0, %s96
    %s114 = sphi 0, %s114
    %s116 = sphi 0, %s114
    %s117 = sphi 0, %s116
    %s131 = sphi 0, %s117
    %s137 = sphi 0, %s139
    %s140 = sphi 0, %s137
    %s141 = sphi 0, %s140
    %s157 = sphi 0, %s141
    %s161 = sphi 0, %s161
    %s163 = sphi 0, %s161
    %s164 = sphi 0, %s163
    %s178 = sphi 0, %s164
    %s184 = sphi 0, %s186
    %s187 = sphi 0, %s184
    %s188 = sphi 0, %s187
    %s204 = sphi 0, %s188
    %s210 = sphi 0, %s212
    %s213 = sphi 0, %s210
    %s214 = sphi 0, %s213
    %s230 = sphi 0, %s214
    %s236 = sphi 0, %s238
    %s239 = sphi 0, %s236
    %s240 = sphi 0, %s239
    %s256 = sphi 0, %s240
  $region4: #{residual_conv_block.4} parent=0 // loop_header_branch
    %20 = sbr.rel (%p18) target = $region8
  $region5: #{residual_conv_block.4} parent=0 // loop_body
    %s22 = ssub.s32 %s17, 1
    %s23 = ssub.s32 %s17, 2
    %s24 = sadd.s32 %s17, 1
    %s25 = ssub.s32 %s17, %s24
    %p26 = scmp.eq.s32.totalorder %s25, 0
    %s28 = sadd.s32 %s27, 1
    %s29 = scalar_select %p26, %s27, %s28
    %p32 = pneg %p26
    %p33 = scmp.eq.s32.totalorder %s17, 3
    %p34 = por %p32, %p33
    %p35 = scmp.ne.s32.totalorder %s27, %s30
    %p36 = scmp.eq.s32.totalorder %s17, 0
    %p37 = por %p35, %p36
    %p38 = scmp.ne.s32.totalorder %s27, %s30
    %p39 = scmp.eq.s32.totalorder %s22, 3
    %p40 = por %p38, %p39
    %p41 = scmp.ne.s32.totalorder %s30, %s31
    %p42 = scmp.eq.s32.totalorder %s22, 0
    %p43 = por %p41, %p42
    %p44 = scmp.ne.s32.totalorder %s30, %s31
    %p45 = scmp.eq.s32.totalorder %s23, 3
    %p46 = por %p44, %p45
    %p48 = scmp.ne.s32.totalorder %s31, %s47
    %p49 = scmp.eq.s32.totalorder %s23, 0
    %p50 = por %p48, %p49
    %s52 = sadd.s32 %s51, 1
    %p55 = scmp.eq.s32.totalorder %s17, 3
    %p56 = scmp.ne.s32.totalorder %s51, %s53
    %p57 = scmp.eq.s32.totalorder %s17, 0
    %p58 = por %p56, %p57
    %p59 = scmp.ne.s32.totalorder %s51, %s53
    %p60 = scmp.eq.s32.totalorder %s22, 3
    %p61 = por %p59, %p60
    %p62 = scmp.ne.s32.totalorder %s53, %s54
    %p63 = scmp.eq.s32.totalorder %s22, 0
    %p64 = por %p62, %p63
    %p65 = scmp.ne.s32.totalorder %s53, %s54
    %p66 = scmp.eq.s32.totalorder %s23, 3
    %p67 = por %p65, %p66
    %p69 = scmp.ne.s32.totalorder %s54, %s68
    %p70 = scmp.eq.s32.totalorder %s23, 0
    %p71 = por %p69, %p70
    %s73 = sadd.s32 %s72, 1
    %p76 = scmp.eq.s32.totalorder %s17, 3
    %p77 = scmp.ne.s32.totalorder %s72, %s74
    %p78 = scmp.eq.s32.totalorder %s17, 0
    %p79 = por %p77, %p78
    %p80 = scmp.ne.s32.totalorder %s72, %s74
    %p81 = scmp.eq.s32.totalorder %s22, 3
    %p82 = por %p80, %p81
    %p83 = scmp.ne.s32.totalorder %s74, %s75
    %p84 = scmp.eq.s32.totalorder %s22, 0
    %p85 = por %p83, %p84
    %p86 = scmp.ne.s32.totalorder %s74, %s75
    %p87 = scmp.eq.s32.totalorder %s23, 3
    %p88 = por %p86, %p87
    %p90 = scmp.ne.s32.totalorder %s75, %s89
    %p91 = scmp.eq.s32.totalorder %s23, 0
    %p92 = por %p90, %p91
    %s94 = sadd.s32 %s93, 1
    %p97 = scmp.eq.s32.totalorder %s17, 3
    %p98 = scmp.ne.s32.totalorder %s93, %s95
    %p99 = scmp.eq.s32.totalorder %s17, 0
    %p100 = por %p98, %p99
    %p101 = scmp.ne.s32.totalorder %s93, %s95
    %p102 = scmp.eq.s32.totalorder %s22, 3
    %p103 = por %p101, %p102
    %p104 = scmp.ne.s32.totalorder %s95, %s96
    %p105 = scmp.eq.s32.totalorder %s22, 0
    %p106 = por %p104, %p105
    %p107 = scmp.ne.s32.totalorder %s95, %s96
    %p108 = scmp.eq.s32.totalorder %s23, 3
    %p109 = por %p107, %p108
    %p111 = scmp.ne.s32.totalorder %s96, %s110
    %p112 = scmp.eq.s32.totalorder %s23, 0
    %p113 = por %p111, %p112
    %s115 = sadd.s32 %s114, 1
    %p118 = scmp.eq.s32.totalorder %s17, 3
    %p119 = scmp.ne.s32.totalorder %s114, %s116
    %p120 = scmp.eq.s32.totalorder %s17, 0
    %p121 = por %p119, %p120
    %p122 = scmp.ne.s32.totalorder %s114, %s116
    %p123 = scmp.eq.s32.totalorder %s22, 3
    %p124 = por %p122, %p123
    %p125 = scmp.ne.s32.totalorder %s116, %s117
    %p126 = scmp.eq.s32.totalorder %s22, 0
    %p127 = por %p125, %p126
    %p128 = scmp.ne.s32.totalorder %s116, %s117
    %p129 = scmp.eq.s32.totalorder %s23, 3
    %p130 = por %p128, %p129
    %p132 = scmp.ne.s32.totalorder %s117, %s131
    %p133 = scmp.eq.s32.totalorder %s23, 0
    %p134 = por %p132, %p133
    %s135 = ssub.s32 %s17, %s24
    %p136 = scmp.eq.s32.totalorder %s135, 0
    %s138 = sadd.s32 %s137, 1
    %s139 = scalar_select %p136, %s137, %s138
    %p142 = pneg %p136
    %p143 = scmp.eq.s32.totalorder %s17, 3
    %p144 = por %p142, %p143
    %p145 = scmp.ne.s32.totalorder %s137, %s140
    %p146 = scmp.eq.s32.totalorder %s17, 0
    %p147 = por %p145, %p146
    %p148 = scmp.ne.s32.totalorder %s137, %s140
    %p149 = scmp.eq.s32.totalorder %s22, 3
    %p150 = por %p148, %p149
    %p151 = scmp.ne.s32.totalorder %s140, %s141
    %p152 = scmp.eq.s32.totalorder %s22, 0
    %p153 = por %p151, %p152
    %p154 = scmp.ne.s32.totalorder %s140, %s141
    %p155 = scmp.eq.s32.totalorder %s23, 3
    %p156 = por %p154, %p155
    %p158 = scmp.ne.s32.totalorder %s141, %s157
    %p159 = scmp.eq.s32.totalorder %s23, 0
    %p160 = por %p158, %p159
    %s162 = sadd.s32 %s161, 1
    %p165 = scmp.eq.s32.totalorder %s17, 3
    %p166 = scmp.ne.s32.totalorder %s161, %s163
    %p167 = scmp.eq.s32.totalorder %s17, 0
    %p168 = por %p166, %p167
    %p169 = scmp.ne.s32.totalorder %s161, %s163
    %p170 = scmp.eq.s32.totalorder %s22, 3
    %p171 = por %p169, %p170
    %p172 = scmp.ne.s32.totalorder %s163, %s164
    %p173 = scmp.eq.s32.totalorder %s22, 0
    %p174 = por %p172, %p173
    %p175 = scmp.ne.s32.totalorder %s163, %s164
    %p176 = scmp.eq.s32.totalorder %s23, 3
    %p177 = por %p175, %p176
    %p179 = scmp.ne.s32.totalorder %s164, %s178
    %p180 = scmp.eq.s32.totalorder %s23, 0
    %p181 = por %p179, %p180
    %s182 = ssub.s32 %s17, %s24
    %p183 = scmp.eq.s32.totalorder %s182, 0
    %s185 = sadd.s32 %s184, 1
    %s186 = scalar_select %p183, %s184, %s185
    %p189 = pneg %p183
    %p190 = scmp.eq.s32.totalorder %s17, 3
    %p191 = por %p189, %p190
    %p192 = scmp.ne.s32.totalorder %s184, %s187
    %p193 = scmp.eq.s32.totalorder %s17, 0
    %p194 = por %p192, %p193
    %p195 = scmp.ne.s32.totalorder %s184, %s187
    %p196 = scmp.eq.s32.totalorder %s22, 3
    %p197 = por %p195, %p196
    %p198 = scmp.ne.s32.totalorder %s187, %s188
    %p199 = scmp.eq.s32.totalorder %s22, 0
    %p200 = por %p198, %p199
    %p201 = scmp.ne.s32.totalorder %s187, %s188
    %p202 = scmp.eq.s32.totalorder %s23, 3
    %p203 = por %p201, %p202
    %p205 = scmp.ne.s32.totalorder %s188, %s204
    %p206 = scmp.eq.s32.totalorder %s23, 0
    %p207 = por %p205, %p206
    %s208 = ssub.s32 %s17, %s24
    %p209 = scmp.eq.s32.totalorder %s208, 0
    %s211 = sadd.s32 %s210, 1
    %s212 = scalar_select %p209, %s210, %s211
    %p215 = pneg %p209
    %p216 = scmp.eq.s32.totalorder %s17, 3
    %p217 = por %p215, %p216
    %p218 = scmp.ne.s32.totalorder %s210, %s213
    %p219 = scmp.eq.s32.totalorder %s17, 0
    %p220 = por %p218, %p219
    %p221 = scmp.ne.s32.totalorder %s210, %s213
    %p222 = scmp.eq.s32.totalorder %s22, 3
    %p223 = por %p221, %p222
    %p224 = scmp.ne.s32.totalorder %s213, %s214
    %p225 = scmp.eq.s32.totalorder %s22, 0
    %p226 = por %p224, %p225
    %p227 = scmp.ne.s32.totalorder %s213, %s214
    %p228 = scmp.eq.s32.totalorder %s23, 3
    %p229 = por %p227, %p228
    %p231 = scmp.ne.s32.totalorder %s214, %s230
    %p232 = scmp.eq.s32.totalorder %s23, 0
    %p233 = por %p231, %p232
    %s234 = ssub.s32 %s17, %s24
    %p235 = scmp.eq.s32.totalorder %s234, 0
    %s237 = sadd.s32 %s236, 1
    %s238 = scalar_select %p235, %s236, %s237
    %p241 = pneg %p235
    %p242 = scmp.eq.s32.totalorder %s17, 3
    %p243 = por %p241, %p242
    %p244 = scmp.ne.s32.totalorder %s236, %s239
    %p245 = scmp.eq.s32.totalorder %s17, 0
    %p246 = por %p244, %p245
    %p247 = scmp.ne.s32.totalorder %s236, %s239
    %p248 = scmp.eq.s32.totalorder %s22, 3
    %p249 = por %p247, %p248
    %p250 = scmp.ne.s32.totalorder %s239, %s240
    %p251 = scmp.eq.s32.totalorder %s22, 0
    %p252 = por %p250, %p251
    %p253 = scmp.ne.s32.totalorder %s239, %s240
    %p254 = scmp.eq.s32.totalorder %s23, 3
    %p255 = por %p253, %p254
    %p257 = scmp.ne.s32.totalorder %s240, %s256
    %p258 = scmp.eq.s32.totalorder %s23, 0
    %p259 = por %p257, %p258
    %p260 = scmp.le.s32.totalorder 1, %s17
    %p261 = scmp.lt.s32.totalorder %s17, 5
    %p262 = pnand %p260, %p261
    %p263 = pneg %p262
    // Predicated region
    $region9: #{residual_conv_block.4} parent=5 // pred_check
      _
    $region10: #{residual_conv_block.4} parent=5 // pred_check_branch
      %265 = sbr.rel (%p262) target = $region12
    $region11: #{residual_conv_block.4} parent=5 // pred_region
      %s266 = ssub.s32 %s17, 1
      // Predicated region
      $region13: #{residual_conv_block.4} parent=11 // pred_check
        %p267 = pneg %p64
      $region14: #{residual_conv_block.4} parent=11 // pred_check_branch
        %269 = sbr.rel (%p267) target = $region16
      $region15: #{residual_conv_block.4} parent=11 // pred_region
        _
      $region16: #{residual_conv_block.4} parent=11 // pred_fallthru
        _
      // Predicated region
      $region17: #{residual_conv_block.4} parent=11 // pred_check
        %p270 = pneg %p85
      $region18: #{residual_conv_block.4} parent=11 // pred_check_branch
        %272 = sbr.rel (%p270) target = $region20
      $region19: #{residual_conv_block.4} parent=11 // pred_region
        _
      $region20: #{residual_conv_block.4} parent=11 // pred_fallthru
        _
      // Predicated region
      $region21: #{residual_conv_block.4} parent=11 // pred_check
        %p273 = pneg %p106
      $region22: #{residual_conv_block.4} parent=11 // pred_check_branch
        %275 = sbr.rel (%p273) target = $region24
      $region23: #{residual_conv_block.4} parent=11 // pred_region
        _
      $region24: #{residual_conv_block.4} parent=11 // pred_fallthru
        _
      // Predicated region
      $region25: #{residual_conv_block.4} parent=11 // pred_check
        %p276 = pneg %p127
      $region26: #{residual_conv_block.4} parent=11 // pred_check_branch
        %278 = sbr.rel (%p276) target = $region28
      $region27: #{residual_conv_block.4} parent=11 // pred_region
        _
      $region28: #{residual_conv_block.4} parent=11 // pred_fallthru
        _
      // Predicated region
      $region29: #{residual_conv_block.4} parent=11 // pred_check
        %p279 = pneg %p174
      $region30: #{residual_conv_block.4} parent=11 // pred_check_branch
        %281 = sbr.rel (%p279) target = $region32
      $region31: #{residual_conv_block.4} parent=11 // pred_region
        _
      $region32: #{residual_conv_block.4} parent=11 // pred_fallthru
        _
    $region12: #{residual_conv_block.4} parent=5 // pred_fallthru
      _
    %p282 = scmp.lt.s32.totalorder %s17, 4
    // Predicated region
    $region33: #{residual_conv_block.4} parent=5 // pred_check
      %p283 = pneg %p282
    $region34: #{residual_conv_block.4} parent=5 // pred_check_branch
      %285 = sbr.rel (%p283) target = $region36
    $region35: #{residual_conv_block.4} parent=5 // pred_region
      // Predicated region
      $region37: #{residual_conv_block.4} parent=35 // pred_check
        %p286 = pneg %p37
      $region38: #{residual_conv_block.4} parent=35 // pred_check_branch
        %288 = sbr.rel (%p286) target = $region40
      $region39: #{residual_conv_block.4} parent=35 // pred_region
        %p289 = scmp.lt.s32.totalorder %s17, 3
        %s290 = scalar_select %p289, %s17, 3
        %s291 = smul.addr %s290, 2
        %s292 = smul.addr %s291, 2
        %s293 = scalar_lea.vmem %s0, %s292
      $region40: #{residual_conv_block.4} parent=35 // pred_fallthru
        _
      // Predicated region
      $region41: #{residual_conv_block.4} parent=35 // pred_check
        %p294 = pneg %p147
      $region42: #{residual_conv_block.4} parent=35 // pred_check_branch
        %296 = sbr.rel (%p294) target = $region44
      $region43: #{residual_conv_block.4} parent=35 // pred_region
        %p297 = scmp.lt.s32.totalorder %s17, 3
        %s298 = scalar_select %p297, %s17, 3
        %s299 = smul.addr %s298, 2
        %s300 = scalar_lea.vmem %s5, %s299
      $region44: #{residual_conv_block.4} parent=35 // pred_fallthru
        _
    $region36: #{residual_conv_block.4} parent=5 // pred_fallthru
      _
    %p301 = scmp.le.s32.totalorder 1, %s17
    %p302 = scmp.lt.s32.totalorder %s17, 5
    %p303 = pnand %p301, %p302
    %p304 = pneg %p303
    // Predicated region
    $region45: #{residual_conv_block.4} parent=5 // pred_check
      _
    $region46: #{residual_conv_block.4} parent=5 // pred_check_branch
      %306 = sbr.rel (%p303) target = $region48
    $region47: #{residual_conv_block.4} parent=5 // pred_region
      %s307 = ssub.s32 %s17, 1
      %p308 = scmp.lt.s32.totalorder %s22, 3
      %s309 = scalar_select %p308, %s22, 3
      %s310 = smul.addr %s309, 2
      %s311 = smul.addr %s310, 2
      %s312 = scalar_lea.vmem %s0, %s311
      %p313 = pneg %p43
      %p314 = pneg %p40
      %p315 = pneg %p64
      %p316 = pneg %p61
      %p317 = pneg %p85
      %p318 = pneg %p82
      %p319 = pneg %p106
      %p320 = pneg %p103
      %p321 = pneg %p127
      %p322 = pneg %p124
      %p323 = scmp.lt.s32.totalorder %s22, 3
      %s324 = scalar_select %p323, %s22, 3
      %s325 = smul.addr %s324, 2
      %s326 = scalar_lea.vmem %s5, %s325
      %p327 = pneg %p153
      %p328 = pneg %p150
      %p329 = pneg %p174
      %p330 = pneg %p171
      %p331 = pneg %p200
      %p332 = pneg %p197
      %p333 = scmp.lt.s32.totalorder %s22, 3
      %s334 = scalar_select %p333, %s22, 3
      %s335 = smul.addr %s334, 2
      %s336 = smul.addr %s335, 2
      %s337 = scalar_lea.vmem %s7, %s336
      %p338 = pneg %p226
      %p339 = pneg %p223
      %p340 = scmp.lt.s32.totalorder %s22, 3
      %s341 = scalar_select %p340, %s22, 3
      %s342 = smul.addr %s341, 4
      %s343 = scalar_lea.vmem %s8, %s342
      %p344 = pneg %p252
      %p345 = pneg %p249
      %p346 = scmp.lt.s32.totalorder %s22, 3
      %s347 = scalar_select %p346, %s22, 3
      %s348 = smul.addr %s347, 4
      %s349 = scalar_lea.vmem %s9, %s348
      %p350 = scmp.lt.s32.totalorder %s22, 3
      %s351 = scalar_select %p350, %s22, 3
      %s352 = smul.addr %s351, 2
      %s353 = smul.addr %s352, 2
      %s354 = scalar_lea.vmem %s0, %s353
      %p355 = scmp.lt.s32.totalorder %s22, 3
      %s356 = scalar_select %p355, %s22, 3
      %s357 = smul.addr %s356, 2
      %s358 = scalar_lea.vmem %s5, %s357
      %p359 = scmp.lt.s32.totalorder %s22, 3
      %s360 = scalar_select %p359, %s22, 3
      %s361 = smul.addr %s360, 2
      %s362 = smul.addr %s361, 2
      %s363 = scalar_lea.vmem %s7, %s362
      %p364 = scmp.lt.s32.totalorder %s22, 3
      %s365 = scalar_select %p364, %s22, 3
      %s366 = smul.addr %s365, 4
      %s367 = scalar_lea.vmem %s8, %s366
      %p368 = scmp.lt.s32.totalorder %s22, 3
      %s369 = scalar_select %p368, %s22, 3
      %s370 = smul.addr %s369, 4
      %s371 = scalar_lea.vmem %s9, %s370
      %v373 = vld [vmem:[%s354] sm:$0xf]
      %v374 = vld [vmem:[%s2] sm:$0xf]
      %v375 = vunpack.c.l.bf16 %v373
      %377 = vset.pattern.permute.xlu0 0
      %378 = vperm.xlu0 %377, %v374
      %v379 = vpop.permute.xlu0 %378
      %v381 = vunpack.c.l.s4 839922192
      %v382 = vunpack.c.0.s8 %v381
      %v383 = vlaneseq
      %v384 = vshrl.u32 %v383, 7
      %v385 = vsub.s32 %v382, %v384
      %v386 = vrot.slane %v379, %v385
      %v388 = vmul.f32 %v375, %v386
      %v389 = vld [vmem:[%s3] sm:$0xf]
      %391 = vset.pattern.permute.xlu0 0
      %392 = vperm.xlu0 %391, %v389
      %v393 = vpop.permute.xlu0 %392
      %v395 = vunpack.c.l.s4 839922192
      %v396 = vunpack.c.0.s8 %v395
      %v397 = vlaneseq
      %v398 = vshrl.u32 %v397, 7
      %v399 = vsub.s32 %v396, %v398
      %v400 = vrot.slane %v393, %v399
      %v402 = vadd.f32 %v388, %v400
      %s403 = sld [smem:[#allocation2]]
      %vm404 = vcmp.ge.f32.partialorder %v402, 0.0
      %v405 = vstv %s403
      %v406 = vmul.f32 %v405, %v402
      %v407 = vsel %vm404, %v402, %v406
      %v408 = vld [vmem:[%s358] sm:$0x3]
      %v410 = vlaneseq
      %v411 = vshrl.u32 %v410, 7
      %v412 = vsub.s32 0, %v411
      %v413 = vrot.slane %v408, %v412
      %v414 = vlaneseq
      %v415 = vshrl.u32 %v414, 7
      %v416 = vsub.s32 1, %v415
      %v417 = vrot.slane %v408, %v416
      %v418 = vcombine.low %v413, %v417
      %v420 = vmul.f32 %v407, %v418
      %v422 = vcombine.high %v420, %v420
      %v424 = vpack.c.bf16 %v420, %v420
      %v425 = vpack.c.bf16 %v422, %v422
      %v426 = vld [vmem:[%s1] sm:$0x3]
      %s427 = scalar_lea.vmem %s1, 2
      %v428 = vld [vmem:[%s427] sm:$0x3]
      %431 = vrot.lane.b32.xlu0 %v424, 127
      %v432 = vpop.permute.xlu0 %431
      %433 = vrot.lane.b32.xlu0 %v425, 127
      %v434 = vpop.permute.xlu0 %433
      %vm435 = vcmask 1039360
      %v436 = vsel %vm435, %v432, %v434
      %vm437 = vcmask 31744
      %v439 = vsel %vm437, %v428, 0
      %vm441 = vcmask 1041408
      %v443 = vsel %vm441, %v436, 0
      %v446 = vsel %vm441, %v434, 0
      %448 = vmatprep.subr.bf16.mxu0 0
      %449 = vmatpush1.bf16.msra.mxu0 0
      %450 = vmatprep.subr.bf16.mxu0 0
      %451 = vmatpush1.bf16.msra.mxu0 0
      %452 = vmatprep.subr.bf16.mxu0 0
      %453 = vmatpush1.bf16.msra.mxu0 0
      %454 = vmatprep.subr.bf16.mxu0 0
      %455 = vmatpush1.bf16.msra.mxu0 0
      %456 = vmatprep.subr.bf16.mxu0 0
      %457 = vmatpush1.bf16.msra.mxu0 0
      %458 = vmatprep.subr.bf16.mxu0 0
      %459 = vmatpush1.bf16.msra.mxu0 0
      %460 = vmatprep.subr.bf16.mxu0 0
      %461 = vmatpush1.bf16.msra.mxu0 0
      %462 = vmatprep.subr.bf16.mxu0 %v446
      %463 = vmatpush1.bf16.msra.mxu0 %v443
      %464 = vmatprep.subr.bf16.mxu0 0
      %465 = vmatpush2.bf16.msra.mxu0 0
      %466 = vmatprep.subr.bf16.mxu0 0
      %467 = vmatpush2.bf16.msra.mxu0 0
      %468 = vmatprep.subr.bf16.mxu0 0
      %469 = vmatpush2.bf16.msra.mxu0 0
      %470 = vmatprep.subr.bf16.mxu0 0
      %471 = vmatpush2.bf16.msra.mxu0 0
      %472 = vmatprep.subr.bf16.mxu0 0
      %473 = vmatpush2.bf16.msra.mxu0 0
      %474 = vmatprep.subr.bf16.mxu0 0
      %475 = vmatpush2.bf16.msra.mxu0 0
      %476 = vmatprep.subr.bf16.mxu0 0
      %477 = vmatpush2.bf16.msra.mxu0 0
      %478 = vmatprep.subr.bf16.mxu0 0
      %479 = vmatpush2.bf16.msra.mxu0 0
      %480 = vmatprep.mubr.bf16.mxu0 0
      %481 = vmatmul.mubr.bf16.gmra.mxu0 %v439
      %v482 = vpop.f32.mrf.mxu0
      %v483 = vadd.f32 0.0, %v482
      %v484 = vpop.f32.mrf.mxu0
      %v485 = vadd.f32 0.0, %v484
      %v486 = vpop.f32.mrf.mxu0
      %v487 = vpop.f32.mrf.mxu0
      %488 = vdwg.mxu0
      %v490 = vsel %vm437, %v426, 0
      %v493 = vsel %vm441, %v424, 0
      %v496 = vsel %vm441, %v425, 0
      %498 = vmatprep.subr.bf16.mxu0 0
      %499 = vmatpush1.bf16.msra.mxu0 0
      %500 = vmatprep.subr.bf16.mxu0 0
      %501 = vmatpush1.bf16.msra.mxu0 0
      %502 = vmatprep.subr.bf16.mxu0 0
      %503 = vmatpush1.bf16.msra.mxu0 0
      %504 = vmatprep.subr.bf16.mxu0 0
      %505 = vmatpush1.bf16.msra.mxu0 0
      %506 = vmatprep.subr.bf16.mxu0 0
      %507 = vmatpush1.bf16.msra.mxu0 0
      %508 = vmatprep.subr.bf16.mxu0 0
      %509 = vmatpush1.bf16.msra.mxu0 0
      %510 = vmatprep.subr.bf16.mxu0 0
      %511 = vmatpush1.bf16.msra.mxu0 0
      %512 = vmatprep.subr.bf16.mxu0 %v496
      %513 = vmatpush1.bf16.msra.mxu0 %v493
      %514 = vmatprep.subr.bf16.mxu0 0
      %515 = vmatpush2.bf16.msra.mxu0 0
      %516 = vmatprep.subr.bf16.mxu0 0
      %517 = vmatpush2.bf16.msra.mxu0 0
      %518 = vmatprep.subr.bf16.mxu0 0
      %519 = vmatpush2.bf16.msra.mxu0 0
      %520 = vmatprep.subr.bf16.mxu0 0
      %521 = vmatpush2.bf16.msra.mxu0 0
      %522 = vmatprep.subr.bf16.mxu0 0
      %523 = vmatpush2.bf16.msra.mxu0 0
      %524 = vmatprep.subr.bf16.mxu0 0
      %525 = vmatpush2.bf16.msra.mxu0 0
      %526 = vmatprep.subr.bf16.mxu0 0
      %527 = vmatpush2.bf16.msra.mxu0 0
      %528 = vmatprep.subr.bf16.mxu0 0
      %529 = vmatpush2.bf16.msra.mxu0 0
      %530 = vmatprep.mubr.bf16.mxu0 0
      %531 = vmatmul.mubr.bf16.gmra.mxu0 %v490
      %v532 = vpop.f32.mrf.mxu0
      %v533 = vadd.f32 %v483, %v532
      %v534 = vpop.f32.mrf.mxu0
      %v535 = vadd.f32 %v485, %v534
      %v536 = vpop.f32.mrf.mxu0
      %v537 = vpop.f32.mrf.mxu0
      %538 = vdwg.mxu0
      %s539 = scalar_lea.vmem %s1, 4
      %v540 = vld [vmem:[%s539] sm:$0x3]
      %541 = vrot.lane.b32.xlu0 %v424, 126
      %v542 = vpop.permute.xlu0 %541
      %543 = vrot.lane.b32.xlu0 %v425, 126
      %v544 = vpop.permute.xlu0 %543
      %vm545 = vcmask 1031168
      %v546 = vsel %vm545, %v542, %v544
      %v548 = vsel %vm437, %v540, 0
      %v551 = vsel %vm441, %v546, 0
      %v554 = vsel %vm441, %v544, 0
      %556 = vmatprep.subr.bf16.mxu0 0
      %557 = vmatpush1.bf16.msra.mxu0 0
      %558 = vmatprep.subr.bf16.mxu0 0
      %559 = vmatpush1.bf16.msra.mxu0 0
      %560 = vmatprep.subr.bf16.mxu0 0
      %561 = vmatpush1.bf16.msra.mxu0 0
      %562 = vmatprep.subr.bf16.mxu0 0
      %563 = vmatpush1.bf16.msra.mxu0 0
      %564 = vmatprep.subr.bf16.mxu0 0
      %565 = vmatpush1.bf16.msra.mxu0 0
      %566 = vmatprep.subr.bf16.mxu0 0
      %567 = vmatpush1.bf16.msra.mxu0 0
      %568 = vmatprep.subr.bf16.mxu0 0
      %569 = vmatpush1.bf16.msra.mxu0 0
      %570 = vmatprep.subr.bf16.mxu0 %v554
      %571 = vmatpush1.bf16.msra.mxu0 %v551
      %572 = vmatprep.subr.bf16.mxu0 0
      %573 = vmatpush2.bf16.msra.mxu0 0
      %574 = vmatprep.subr.bf16.mxu0 0
      %575 = vmatpush2.bf16.msra.mxu0 0
      %576 = vmatprep.subr.bf16.mxu0 0
      %577 = vmatpush2.bf16.msra.mxu0 0
      %578 = vmatprep.subr.bf16.mxu0 0
      %579 = vmatpush2.bf16.msra.mxu0 0
      %580 = vmatprep.subr.bf16.mxu0 0
      %581 = vmatpush2.bf16.msra.mxu0 0
      %582 = vmatprep.subr.bf16.mxu0 0
      %583 = vmatpush2.bf16.msra.mxu0 0
      %584 = vmatprep.subr.bf16.mxu0 0
      %585 = vmatpush2.bf16.msra.mxu0 0
      %586 = vmatprep.subr.bf16.mxu0 0
      %587 = vmatpush2.bf16.msra.mxu0 0
      %588 = vmatprep.mubr.bf16.mxu0 0
      %589 = vmatmul.mubr.bf16.gmra.mxu0 %v548
      %v590 = vpop.f32.mrf.mxu0
      %v591 = vadd.f32 0.0, %v590
      %v592 = vpop.f32.mrf.mxu0
      %v593 = vadd.f32 0.0, %v592
      %v594 = vpop.f32.mrf.mxu0
      %v595 = vpop.f32.mrf.mxu0
      %596 = vdwg.mxu0
      %v597 = vadd.f32 %v533, %v591
      %v598 = vadd.f32 %v535, %v593
      %s599 = scalar_lea.vmem %s1, 6
      %v600 = vld [vmem:[%s599] sm:$0x3]
      %601 = vrot.lane.b32.xlu0 %v424, 110
      %v602 = vpop.permute.xlu0 %601
      %603 = vrot.lane.b32.xlu0 %v425, 110
      %v604 = vpop.permute.xlu0 %603
      %vm605 = vcmask 900096
      %v606 = vsel %vm605, %v602, %v604
      %v608 = vsel %vm437, %v600, 0
      %v611 = vsel %vm441, %v606, 0
      %v614 = vsel %vm441, %v604, 0
      %616 = vmatprep.subr.bf16.mxu0 0
      %617 = vmatpush1.bf16.msra.mxu0 0
      %618 = vmatprep.subr.bf16.mxu0 0
      %619 = vmatpush1.bf16.msra.mxu0 0
      %620 = vmatprep.subr.bf16.mxu0 0
      %621 = vmatpush1.bf16.msra.mxu0 0
      %622 = vmatprep.subr.bf16.mxu0 0
      %623 = vmatpush1.bf16.msra.mxu0 0
      %624 = vmatprep.subr.bf16.mxu0 0
      %625 = vmatpush1.bf16.msra.mxu0 0
      %626 = vmatprep.subr.bf16.mxu0 0
      %627 = vmatpush1.bf16.msra.mxu0 0
      %628 = vmatprep.subr.bf16.mxu0 0
      %629 = vmatpush1.bf16.msra.mxu0 0
      %630 = vmatprep.subr.bf16.mxu0 %v614
      %631 = vmatpush1.bf16.msra.mxu0 %v611
      %632 = vmatprep.subr.bf16.mxu0 0
      %633 = vmatpush2.bf16.msra.mxu0 0
      %634 = vmatprep.subr.bf16.mxu0 0
      %635 = vmatpush2.bf16.msra.mxu0 0
      %636 = vmatprep.subr.bf16.mxu0 0
      %637 = vmatpush2.bf16.msra.mxu0 0
      %638 = vmatprep.subr.bf16.mxu0 0
      %639 = vmatpush2.bf16.msra.mxu0 0
      %640 = vmatprep.subr.bf16.mxu0 0
      %641 = vmatpush2.bf16.msra.mxu0 0
      %642 = vmatprep.subr.bf16.mxu0 0
      %643 = vmatpush2.bf16.msra.mxu0 0
      %644 = vmatprep.subr.bf16.mxu0 0
      %645 = vmatpush2.bf16.msra.mxu0 0
      %646 = vmatprep.subr.bf16.mxu0 0
      %647 = vmatpush2.bf16.msra.mxu0 0
      %648 = vmatprep.mubr.bf16.mxu0 0
      %649 = vmatmul.mubr.bf16.gmra.mxu0 %v608
      %v650 = vpop.f32.mrf.mxu0
      %v651 = vadd.f32 0.0, %v650
      %v652 = vpop.f32.mrf.mxu0
      %v653 = vadd.f32 0.0, %v652
      %v654 = vpop.f32.mrf.mxu0
      %v655 = vpop.f32.mrf.mxu0
      %656 = vdwg.mxu0
      %v657 = vadd.f32 %v597, %v651
      %v658 = vadd.f32 %v598, %v653
      %s659 = scalar_lea.vmem %s1, 8
      %v660 = vld [vmem:[%s659] sm:$0x3]
      %661 = vrot.lane.b32.xlu0 %v424, 109
      %v662 = vpop.permute.xlu0 %661
      %663 = vrot.lane.b32.xlu0 %v425, 109
      %v664 = vpop.permute.xlu0 %663
      %vm665 = vcmask 891904
      %v666 = vsel %vm665, %v662, %v664
      %v668 = vsel %vm437, %v660, 0
      %v671 = vsel %vm441, %v666, 0
      %v674 = vsel %vm441, %v664, 0
      %676 = vmatprep.subr.bf16.mxu0 0
      %677 = vmatpush1.bf16.msra.mxu0 0
      %678 = vmatprep.subr.bf16.mxu0 0
      %679 = vmatpush1.bf16.msra.mxu0 0
      %680 = vmatprep.subr.bf16.mxu0 0
      %681 = vmatpush1.bf16.msra.mxu0 0
      %682 = vmatprep.subr.bf16.mxu0 0
      %683 = vmatpush1.bf16.msra.mxu0 0
      %684 = vmatprep.subr.bf16.mxu0 0
      %685 = vmatpush1.bf16.msra.mxu0 0
      %686 = vmatprep.subr.bf16.mxu0 0
      %687 = vmatpush1.bf16.msra.mxu0 0
      %688 = vmatprep.subr.bf16.mxu0 0
      %689 = vmatpush1.bf16.msra.mxu0 0
      %690 = vmatprep.subr.bf16.mxu0 %v674
      %691 = vmatpush1.bf16.msra.mxu0 %v671
      %692 = vmatprep.subr.bf16.mxu0 0
      %693 = vmatpush2.bf16.msra.mxu0 0
      %694 = vmatprep.subr.bf16.mxu0 0
      %695 = vmatpush2.bf16.msra.mxu0 0
      %696 = vmatprep.subr.bf16.mxu0 0
      %697 = vmatpush2.bf16.msra.mxu0 0
      %698 = vmatprep.subr.bf16.mxu0 0
      %699 = vmatpush2.bf16.msra.mxu0 0
      %700 = vmatprep.subr.bf16.mxu0 0
      %701 = vmatpush2.bf16.msra.mxu0 0
      %702 = vmatprep.subr.bf16.mxu0 0
      %703 = vmatpush2.bf16.msra.mxu0 0
      %704 = vmatprep.subr.bf16.mxu0 0
      %705 = vmatpush2.bf16.msra.mxu0 0
      %706 = vmatprep.subr.bf16.mxu0 0
      %707 = vmatpush2.bf16.msra.mxu0 0
      %708 = vmatprep.mubr.bf16.mxu0 0
      %709 = vmatmul.mubr.bf16.gmra.mxu0 %v668
      %v710 = vpop.f32.mrf.mxu0
      %v711 = vadd.f32 0.0, %v710
      %v712 = vpop.f32.mrf.mxu0
      %v713 = vadd.f32 0.0, %v712
      %v714 = vpop.f32.mrf.mxu0
      %v715 = vpop.f32.mrf.mxu0
      %716 = vdwg.mxu0
      %v717 = vadd.f32 %v657, %v711
      %v718 = vadd.f32 %v658, %v713
      %s719 = scalar_lea.vmem %s1, 10
      %v720 = vld [vmem:[%s719] sm:$0x3]
      %721 = vrot.lane.b32.xlu0 %v424, 108
      %v722 = vpop.permute.xlu0 %721
      %723 = vrot.lane.b32.xlu0 %v425, 108
      %v724 = vpop.permute.xlu0 %723
      %vm725 = vcmask 883712
      %v726 = vsel %vm725, %v722, %v724
      %v728 = vsel %vm437, %v720, 0
      %v731 = vsel %vm441, %v726, 0
      %v734 = vsel %vm441, %v724, 0
      %736 = vmatprep.subr.bf16.mxu0 0
      %737 = vmatpush1.bf16.msra.mxu0 0
      %738 = vmatprep.subr.bf16.mxu0 0
      %739 = vmatpush1.bf16.msra.mxu0 0
      %740 = vmatprep.subr.bf16.mxu0 0
      %741 = vmatpush1.bf16.msra.mxu0 0
      %742 = vmatprep.subr.bf16.mxu0 0
      %743 = vmatpush1.bf16.msra.mxu0 0
      %744 = vmatprep.subr.bf16.mxu0 0
      %745 = vmatpush1.bf16.msra.mxu0 0
      %746 = vmatprep.subr.bf16.mxu0 0
      %747 = vmatpush1.bf16.msra.mxu0 0
      %748 = vmatprep.subr.bf16.mxu0 0
      %749 = vmatpush1.bf16.msra.mxu0 0
      %750 = vmatprep.subr.bf16.mxu0 %v734
      %751 = vmatpush1.bf16.msra.mxu0 %v731
      %752 = vmatprep.subr.bf16.mxu0 0
      %753 = vmatpush2.bf16.msra.mxu0 0
      %754 = vmatprep.subr.bf16.mxu0 0
      %755 = vmatpush2.bf16.msra.mxu0 0
      %756 = vmatprep.subr.bf16.mxu0 0
      %757 = vmatpush2.bf16.msra.mxu0 0
      %758 = vmatprep.subr.bf16.mxu0 0
      %759 = vmatpush2.bf16.msra.mxu0 0
      %760 = vmatprep.subr.bf16.mxu0 0
      %761 = vmatpush2.bf16.msra.mxu0 0
      %762 = vmatprep.subr.bf16.mxu0 0
      %763 = vmatpush2.bf16.msra.mxu0 0
      %764 = vmatprep.subr.bf16.mxu0 0
      %765 = vmatpush2.bf16.msra.mxu0 0
      %766 = vmatprep.subr.bf16.mxu0 0
      %767 = vmatpush2.bf16.msra.mxu0 0
      %768 = vmatprep.mubr.bf16.mxu0 0
      %769 = vmatmul.mubr.bf16.gmra.mxu0 %v728
      %v770 = vpop.f32.mrf.mxu0
      %v771 = vadd.f32 0.0, %v770
      %v772 = vpop.f32.mrf.mxu0
      %v773 = vadd.f32 0.0, %v772
      %v774 = vpop.f32.mrf.mxu0
      %v775 = vpop.f32.mrf.mxu0
      %776 = vdwg.mxu0
      %v777 = vadd.f32 %v717, %v771
      %v778 = vadd.f32 %v718, %v773
      %s779 = scalar_lea.vmem %s1, 12
      %v780 = vld [vmem:[%s779] sm:$0x3]
      %781 = vrot.lane.b32.xlu0 %v424, 92
      %v782 = vpop.permute.xlu0 %781
      %783 = vrot.lane.b32.xlu0 %v425, 92
      %v784 = vpop.permute.xlu0 %783
      %vm785 = vcmask 752640
      %v786 = vsel %vm785, %v782, %v784
      %v788 = vsel %vm437, %v780, 0
      %v791 = vsel %vm441, %v786, 0
      %v794 = vsel %vm441, %v784, 0
      %796 = vmatprep.subr.bf16.mxu0 0
      %797 = vmatpush1.bf16.msra.mxu0 0
      %798 = vmatprep.subr.bf16.mxu0 0
      %799 = vmatpush1.bf16.msra.mxu0 0
      %800 = vmatprep.subr.bf16.mxu0 0
      %801 = vmatpush1.bf16.msra.mxu0 0
      %802 = vmatprep.subr.bf16.mxu0 0
      %803 = vmatpush1.bf16.msra.mxu0 0
      %804 = vmatprep.subr.bf16.mxu0 0
      %805 = vmatpush1.bf16.msra.mxu0 0
      %806 = vmatprep.subr.bf16.mxu0 0
      %807 = vmatpush1.bf16.msra.mxu0 0
      %808 = vmatprep.subr.bf16.mxu0 0
      %809 = vmatpush1.bf16.msra.mxu0 0
      %810 = vmatprep.subr.bf16.mxu0 %v794
      %811 = vmatpush1.bf16.msra.mxu0 %v791
      %812 = vmatprep.subr.bf16.mxu0 0
      %813 = vmatpush2.bf16.msra.mxu0 0
      %814 = vmatprep.subr.bf16.mxu0 0
      %815 = vmatpush2.bf16.msra.mxu0 0
      %816 = vmatprep.subr.bf16.mxu0 0
      %817 = vmatpush2.bf16.msra.mxu0 0
      %818 = vmatprep.subr.bf16.mxu0 0
      %819 = vmatpush2.bf16.msra.mxu0 0
      %820 = vmatprep.subr.bf16.mxu0 0
      %821 = vmatpush2.bf16.msra.mxu0 0
      %822 = vmatprep.subr.bf16.mxu0 0
      %823 = vmatpush2.bf16.msra.mxu0 0
      %824 = vmatprep.subr.bf16.mxu0 0
      %825 = vmatpush2.bf16.msra.mxu0 0
      %826 = vmatprep.subr.bf16.mxu0 0
      %827 = vmatpush2.bf16.msra.mxu0 0
      %828 = vmatprep.mubr.bf16.mxu0 0
      %829 = vmatmul.mubr.bf16.gmra.mxu0 %v788
      %v830 = vpop.f32.mrf.mxu0
      %v831 = vadd.f32 0.0, %v830
      %v832 = vpop.f32.mrf.mxu0
      %v833 = vadd.f32 0.0, %v832
      %v834 = vpop.f32.mrf.mxu0
      %v835 = vpop.f32.mrf.mxu0
      %836 = vdwg.mxu0
      %v837 = vadd.f32 %v777, %v831
      %v838 = vadd.f32 %v778, %v833
      %s839 = scalar_lea.vmem %s1, 14
      %v840 = vld [vmem:[%s839] sm:$0x3]
      %841 = vrot.lane.b32.xlu0 %v424, 91
      %v842 = vpop.permute.xlu0 %841
      %843 = vrot.lane.b32.xlu0 %v425, 91
      %v844 = vpop.permute.xlu0 %843
      %vm845 = vcmask 744448
      %v846 = vsel %vm845, %v842, %v844
      %v848 = vsel %vm437, %v840, 0
      %v851 = vsel %vm441, %v846, 0
      %v854 = vsel %vm441, %v844, 0
      %856 = vmatprep.subr.bf16.mxu0 0
      %857 = vmatpush1.bf16.msra.mxu0 0
      %858 = vmatprep.subr.bf16.mxu0 0
      %859 = vmatpush1.bf16.msra.mxu0 0
      %860 = vmatprep.subr.bf16.mxu0 0
      %861 = vmatpush1.bf16.msra.mxu0 0
      %862 = vmatprep.subr.bf16.mxu0 0
      %863 = vmatpush1.bf16.msra.mxu0 0
      %864 = vmatprep.subr.bf16.mxu0 0
      %865 = vmatpush1.bf16.msra.mxu0 0
      %866 = vmatprep.subr.bf16.mxu0 0
      %867 = vmatpush1.bf16.msra.mxu0 0
      %868 = vmatprep.subr.bf16.mxu0 0
      %869 = vmatpush1.bf16.msra.mxu0 0
      %870 = vmatprep.subr.bf16.mxu0 %v854
      %871 = vmatpush1.bf16.msra.mxu0 %v851
      %872 = vmatprep.subr.bf16.mxu0 0
      %873 = vmatpush2.bf16.msra.mxu0 0
      %874 = vmatprep.subr.bf16.mxu0 0
      %875 = vmatpush2.bf16.msra.mxu0 0
      %876 = vmatprep.subr.bf16.mxu0 0
      %877 = vmatpush2.bf16.msra.mxu0 0
      %878 = vmatprep.subr.bf16.mxu0 0
      %879 = vmatpush2.bf16.msra.mxu0 0
      %880 = vmatprep.subr.bf16.mxu0 0
      %881 = vmatpush2.bf16.msra.mxu0 0
      %882 = vmatprep.subr.bf16.mxu0 0
      %883 = vmatpush2.bf16.msra.mxu0 0
      %884 = vmatprep.subr.bf16.mxu0 0
      %885 = vmatpush2.bf16.msra.mxu0 0
      %886 = vmatprep.subr.bf16.mxu0 0
      %887 = vmatpush2.bf16.msra.mxu0 0
      %888 = vmatprep.mubr.bf16.mxu0 0
      %889 = vmatmul.mubr.bf16.gmra.mxu0 %v848
      %v890 = vpop.f32.mrf.mxu0
      %v891 = vadd.f32 0.0, %v890
      %v892 = vpop.f32.mrf.mxu0
      %v893 = vadd.f32 0.0, %v892
      %v894 = vpop.f32.mrf.mxu0
      %v895 = vpop.f32.mrf.mxu0
      %896 = vdwg.mxu0
      %v897 = vadd.f32 %v837, %v891
      %v898 = vadd.f32 %v838, %v893
      %s899 = scalar_lea.vmem %s1, 16
      %v900 = vld [vmem:[%s899] sm:$0x3]
      %901 = vrot.lane.b32.xlu0 %v424, 90
      %v902 = vpop.permute.xlu0 %901
      %903 = vrot.lane.b32.xlu0 %v425, 90
      %v904 = vpop.permute.xlu0 %903
      %vm905 = vcmask 736256
      %v906 = vsel %vm905, %v902, %v904
      %v908 = vsel %vm437, %v900, 0
      %v911 = vsel %vm441, %v906, 0
      %v914 = vsel %vm441, %v904, 0
      %916 = vmatprep.subr.bf16.mxu0 0
      %917 = vmatpush1.bf16.msra.mxu0 0
      %918 = vmatprep.subr.bf16.mxu0 0
      %919 = vmatpush1.bf16.msra.mxu0 0
      %920 = vmatprep.subr.bf16.mxu0 0
      %921 = vmatpush1.bf16.msra.mxu0 0
      %922 = vmatprep.subr.bf16.mxu0 0
      %923 = vmatpush1.bf16.msra.mxu0 0
      %924 = vmatprep.subr.bf16.mxu0 0
      %925 = vmatpush1.bf16.msra.mxu0 0
      %926 = vmatprep.subr.bf16.mxu0 0
      %927 = vmatpush1.bf16.msra.mxu0 0
      %928 = vmatprep.subr.bf16.mxu0 0
      %929 = vmatpush1.bf16.msra.mxu0 0
      %930 = vmatprep.subr.bf16.mxu0 %v914
      %931 = vmatpush1.bf16.msra.mxu0 %v911
      %932 = vmatprep.subr.bf16.mxu0 0
      %933 = vmatpush2.bf16.msra.mxu0 0
      %934 = vmatprep.subr.bf16.mxu0 0
      %935 = vmatpush2.bf16.msra.mxu0 0
      %936 = vmatprep.subr.bf16.mxu0 0
      %937 = vmatpush2.bf16.msra.mxu0 0
      %938 = vmatprep.subr.bf16.mxu0 0
      %939 = vmatpush2.bf16.msra.mxu0 0
      %940 = vmatprep.subr.bf16.mxu0 0
      %941 = vmatpush2.bf16.msra.mxu0 0
      %942 = vmatprep.subr.bf16.mxu0 0
      %943 = vmatpush2.bf16.msra.mxu0 0
      %944 = vmatprep.subr.bf16.mxu0 0
      %945 = vmatpush2.bf16.msra.mxu0 0
      %946 = vmatprep.subr.bf16.mxu0 0
      %947 = vmatpush2.bf16.msra.mxu0 0
      %948 = vmatprep.mubr.bf16.mxu0 0
      %949 = vmatmul.mubr.bf16.gmra.mxu0 %v908
      %v950 = vpop.f32.mrf.mxu0
      %v951 = vadd.f32 0.0, %v950
      %v952 = vpop.f32.mrf.mxu0
      %v953 = vadd.f32 0.0, %v952
      %v954 = vpop.f32.mrf.mxu0
      %v955 = vpop.f32.mrf.mxu0
      %956 = vdwg.mxu0
      %v957 = vadd.f32 %v897, %v951
      %v958 = vadd.f32 %v898, %v953
      %v959 = vld [vmem:[%s6] sm:$0x3]
      %v961 = vlaneseq
      %v962 = vshrl.u32 %v961, 7
      %v963 = vsub.s32 0, %v962
      %v964 = vrot.slane %v959, %v963
      %v965 = vlaneseq
      %v966 = vshrl.u32 %v965, 7
      %v967 = vsub.s32 1, %v966
      %v968 = vrot.slane %v959, %v967
      %v971 = vmul.f32 %v957, %v964
      %v972 = vmul.f32 %v958, %v968
      %v973 = vpack.c.bf16 %v971, %v971
      %v974 = vpack.c.bf16 %v972, %v972
      %v977 = vcombine.low %v973, %v974
      %v979 = vunpack.c.l.s4 1983009808
      %v980 = vunpack.c.0.s8 %v979
      %v981 = vlaneseq
      %v982 = vshrl.u32 %v981, 7
      %v983 = vsub.s32 %v980, %v982
      %v984 = vrot.slane %v977, %v983
      %vm986 = vcmask 125954
      %vm987 = vmor %vm986, %vm441
      %988 = vst.msk [vmem:[%s363] sm:$0xf] %vm987, %v984
      %vm989 = vcmask 1043456
      %v990 = vsel %vm989, %v971, 0.0
      %vm991 = vcmask 125952
      %v992 = vsel %vm991, %v972, 0.0
      %v993 = vadd.f32 %v990, %v992
      %994 = vadd.xlane.f32.xlu0 %v993
      %v995 = vpop.xlane.xlu0 %994
      %vm996 = vcmask 3072
      %997 = vst.msk [vmem:[%s367] sm:$0xf] %vm996, %v995
      %v998 = vmul.f32 %v971, %v971
      %v999 = vmul.f32 %v972, %v972
      %v1000 = vsel %vm989, %v998, 0.0
      %v1001 = vsel %vm991, %v999, 0.0
      %v1002 = vadd.f32 %v1000, %v1001
      %1003 = vadd.xlane.f32.xlu0 %v1002
      %v1004 = vpop.xlane.xlu0 %1003
      %1005 = vst.msk [vmem:[%s371] sm:$0xf] %vm996, %v1004
      %p1006 = scmp.lt.s32.totalorder %s22, 3
      %s1007 = scalar_select %p1006, %s22, 3
      %s1008 = smul.addr %s1007, 2
      %s1009 = smul.addr %s1008, 2
      %s1010 = scalar_lea.vmem %s7, %s1009
      %p1011 = scmp.lt.s32.totalorder %s22, 3
      %s1012 = scalar_select %p1011, %s22, 3
      %s1013 = smul.addr %s1012, 4
      %s1014 = scalar_lea.vmem %s8, %s1013
      %p1015 = scmp.lt.s32.totalorder %s22, 3
      %s1016 = scalar_select %p1015, %s22, 3
      %s1017 = smul.addr %s1016, 4
      %s1018 = scalar_lea.vmem %s9, %s1017
      // Predicated region
      $region49: #{residual_conv_block.4} parent=47 // pred_check
        %p1019 = pneg %p197
      $region50: #{residual_conv_block.4} parent=47 // pred_check_branch
        %1021 = sbr.rel (%p1019) target = $region52
      $region51: #{residual_conv_block.4} parent=47 // pred_region
        _
      $region52: #{residual_conv_block.4} parent=47 // pred_fallthru
        _
      // Predicated region
      $region53: #{residual_conv_block.4} parent=47 // pred_check
        %p1022 = pneg %p223
      $region54: #{residual_conv_block.4} parent=47 // pred_check_branch
        %1024 = sbr.rel (%p1022) target = $region56
      $region55: #{residual_conv_block.4} parent=47 // pred_region
        _
      $region56: #{residual_conv_block.4} parent=47 // pred_fallthru
        _
      // Predicated region
      $region57: #{residual_conv_block.4} parent=47 // pred_check
        %p1025 = pneg %p249
      $region58: #{residual_conv_block.4} parent=47 // pred_check_branch
        %1027 = sbr.rel (%p1025) target = $region60
      $region59: #{residual_conv_block.4} parent=47 // pred_region
        _
      $region60: #{residual_conv_block.4} parent=47 // pred_fallthru
        _
    $region48: #{residual_conv_block.4} parent=5 // pred_fallthru
      _
    %p1028 = scmp.le.s32.totalorder 2, %s17
    // Predicated region
    $region61: #{residual_conv_block.4} parent=5 // pred_check
      %p1029 = pneg %p1028
    $region62: #{residual_conv_block.4} parent=5 // pred_check_branch
      %1031 = sbr.rel (%p1029) target = $region64
    $region63: #{residual_conv_block.4} parent=5 // pred_region
      %s1032 = ssub.s32 %s17, 2
      // Predicated region
      $region65: #{residual_conv_block.4} parent=63 // pred_check
        %p1033 = pneg %p203
      $region66: #{residual_conv_block.4} parent=63 // pred_check_branch
        %1035 = sbr.rel (%p1033) target = $region68
      $region67: #{residual_conv_block.4} parent=63 // pred_region
        %p1036 = scmp.lt.s32.totalorder %s23, 3
        %s1037 = scalar_select %p1036, %s23, 3
        %s1038 = smul.addr %s1037, 2
        %s1039 = smul.addr %s1038, 2
        %s1040 = scalar_lea.vmem %s7, %s1039
      $region68: #{residual_conv_block.4} parent=63 // pred_fallthru
        _
      // Predicated region
      $region69: #{residual_conv_block.4} parent=63 // pred_check
        %p1041 = pneg %p229
      $region70: #{residual_conv_block.4} parent=63 // pred_check_branch
        %1043 = sbr.rel (%p1041) target = $region72
      $region71: #{residual_conv_block.4} parent=63 // pred_region
        %p1044 = scmp.lt.s32.totalorder %s23, 3
        %s1045 = scalar_select %p1044, %s23, 3
        %s1046 = smul.addr %s1045, 4
        %s1047 = scalar_lea.vmem %s8, %s1046
      $region72: #{residual_conv_block.4} parent=63 // pred_fallthru
        _
      // Predicated region
      $region73: #{residual_conv_block.4} parent=63 // pred_check
        %p1048 = pneg %p255
      $region74: #{residual_conv_block.4} parent=63 // pred_check_branch
        %1050 = sbr.rel (%p1048) target = $region76
      $region75: #{residual_conv_block.4} parent=63 // pred_region
        %p1051 = scmp.lt.s32.totalorder %s23, 3
        %s1052 = scalar_select %p1051, %s23, 3
        %s1053 = smul.addr %s1052, 4
        %s1054 = scalar_lea.vmem %s9, %s1053
      $region76: #{residual_conv_block.4} parent=63 // pred_fallthru
        _
    $region64: #{residual_conv_block.4} parent=5 // pred_fallthru
      _
  $region6: #{residual_conv_block.4} parent=0 // loop_footer
    %s21 = sadd.s32 1, %s17
  $region7: #{residual_conv_block.4} parent=0 // loop_footer_branch
    %16 = sbr.rel target = $region3
  $region8: #{residual_conv_block.4} parent=0 // loop_exit
    _

// kernel: residual_conv_block.3
$region0: #{residual_conv_block.3}
  #allocation0 [shape = 'u32[]', space=smem, size = 0x4, offset = 0x4, fixed_abs, tag = 'smem constant byte address 0x4 - core index']
  #allocation1 [shape = 'u32[144,128]{1,0:T(1,128)}', space=vmem, size = 0x12000, scoped, tag = 'internal scratch']
  %s0 = inlined_call_operand.vmem [shape: bf16[4,4,182], index: 0, kind: input, shape index: {}]
  %s1 = inlined_call_operand.vmem [shape: bf16[9,4,4], index: 1, kind: input, shape index: {}]
  %s2 = inlined_call_operand.vmem [shape: f32[1,144], index: 2, kind: input, shape index: {}]
  %s3 = inlined_call_operand.vmem [shape: bf16[4,4,144], index: 3, kind: output, shape index: {0}]
  %s4 = inlined_call_operand.vmem [shape: f32[4,4,1], index: 4, kind: output, shape index: {1}]
  %s5 = inlined_call_operand.vmem [shape: f32[4,4,1], index: 5, kind: output, shape index: {2}]
  %6 = xla_tuple %s3, %s4, %s5
  %s7 = sld [smem:[#allocation0]]
  $region61: #{residual_conv_block.3} parent=0
    _
  %s9 = ssub.s32 1, %s7
  %s10 = scalar_select 0, %s9, %s7
  loop: start=0, step=1, limit=6
  $region2: #{residual_conv_block.3} parent=0 // loop_pre_header
    _
  $region3: #{residual_conv_block.3} parent=0 // loop_header
    %s12 = sphi 0, %s16
    %p13 = scmp.ge.s32.totalorder %s12, 6
    %s22 = sphi 0, %s24
    %s25 = sphi 0, %s22
    %s26 = sphi 0, %s25
    %s42 = sphi 0, %s26
    %s46 = sphi 0, %s46
    %s48 = sphi 0, %s46
    %s49 = sphi 0, %s48
    %s63 = sphi 0, %s49
    %s67 = sphi 0, %s67
    %s69 = sphi 0, %s67
    %s70 = sphi 0, %s69
    %s84 = sphi 0, %s70
    %s90 = sphi 0, %s92
    %s93 = sphi 0, %s90
    %s94 = sphi 0, %s93
    %s110 = sphi 0, %s94
    %s116 = sphi 0, %s118
    %s119 = sphi 0, %s116
    %s120 = sphi 0, %s119
    %s136 = sphi 0, %s120
    %s142 = sphi 0, %s144
    %s145 = sphi 0, %s142
    %s146 = sphi 0, %s145
    %s162 = sphi 0, %s146
  $region4: #{residual_conv_block.3} parent=0 // loop_header_branch
    %15 = sbr.rel (%p13) target = $region8
  $region5: #{residual_conv_block.3} parent=0 // loop_body
    %s17 = ssub.s32 %s12, 1
    %s18 = ssub.s32 %s12, 2
    %s19 = sadd.s32 %s12, 1
    %s20 = ssub.s32 %s12, %s19
    %p21 = scmp.eq.s32.totalorder %s20, 0
    %s23 = sadd.s32 %s22, 1
    %s24 = scalar_select %p21, %s22, %s23
    %p27 = pneg %p21
    %p28 = scmp.eq.s32.totalorder %s12, 3
    %p29 = por %p27, %p28
    %p30 = scmp.ne.s32.totalorder %s22, %s25
    %p31 = scmp.eq.s32.totalorder %s12, 0
    %p32 = por %p30, %p31
    %p33 = scmp.ne.s32.totalorder %s22, %s25
    %p34 = scmp.eq.s32.totalorder %s17, 3
    %p35 = por %p33, %p34
    %p36 = scmp.ne.s32.totalorder %s25, %s26
    %p37 = scmp.eq.s32.totalorder %s17, 0
    %p38 = por %p36, %p37
    %p39 = scmp.ne.s32.totalorder %s25, %s26
    %p40 = scmp.eq.s32.totalorder %s18, 3
    %p41 = por %p39, %p40
    %p43 = scmp.ne.s32.totalorder %s26, %s42
    %p44 = scmp.eq.s32.totalorder %s18, 0
    %p45 = por %p43, %p44
    %s47 = sadd.s32 %s46, 1
    %p50 = scmp.eq.s32.totalorder %s12, 3
    %p51 = scmp.ne.s32.totalorder %s46, %s48
    %p52 = scmp.eq.s32.totalorder %s12, 0
    %p53 = por %p51, %p52
    %p54 = scmp.ne.s32.totalorder %s46, %s48
    %p55 = scmp.eq.s32.totalorder %s17, 3
    %p56 = por %p54, %p55
    %p57 = scmp.ne.s32.totalorder %s48, %s49
    %p58 = scmp.eq.s32.totalorder %s17, 0
    %p59 = por %p57, %p58
    %p60 = scmp.ne.s32.totalorder %s48, %s49
    %p61 = scmp.eq.s32.totalorder %s18, 3
    %p62 = por %p60, %p61
    %p64 = scmp.ne.s32.totalorder %s49, %s63
    %p65 = scmp.eq.s32.totalorder %s18, 0
    %p66 = por %p64, %p65
    %s68 = sadd.s32 %s67, 1
    %p71 = scmp.eq.s32.totalorder %s12, 3
    %p72 = scmp.ne.s32.totalorder %s67, %s69
    %p73 = scmp.eq.s32.totalorder %s12, 0
    %p74 = por %p72, %p73
    %p75 = scmp.ne.s32.totalorder %s67, %s69
    %p76 = scmp.eq.s32.totalorder %s17, 3
    %p77 = por %p75, %p76
    %p78 = scmp.ne.s32.totalorder %s69, %s70
    %p79 = scmp.eq.s32.totalorder %s17, 0
    %p80 = por %p78, %p79
    %p81 = scmp.ne.s32.totalorder %s69, %s70
    %p82 = scmp.eq.s32.totalorder %s18, 3
    %p83 = por %p81, %p82
    %p85 = scmp.ne.s32.totalorder %s70, %s84
    %p86 = scmp.eq.s32.totalorder %s18, 0
    %p87 = por %p85, %p86
    %s88 = ssub.s32 %s12, %s19
    %p89 = scmp.eq.s32.totalorder %s88, 0
    %s91 = sadd.s32 %s90, 1
    %s92 = scalar_select %p89, %s90, %s91
    %p95 = pneg %p89
    %p96 = scmp.eq.s32.totalorder %s12, 3
    %p97 = por %p95, %p96
    %p98 = scmp.ne.s32.totalorder %s90, %s93
    %p99 = scmp.eq.s32.totalorder %s12, 0
    %p100 = por %p98, %p99
    %p101 = scmp.ne.s32.totalorder %s90, %s93
    %p102 = scmp.eq.s32.totalorder %s17, 3
    %p103 = por %p101, %p102
    %p104 = scmp.ne.s32.totalorder %s93, %s94
    %p105 = scmp.eq.s32.totalorder %s17, 0
    %p106 = por %p104, %p105
    %p107 = scmp.ne.s32.totalorder %s93, %s94
    %p108 = scmp.eq.s32.totalorder %s18, 3
    %p109 = por %p107, %p108
    %p111 = scmp.ne.s32.totalorder %s94, %s110
    %p112 = scmp.eq.s32.totalorder %s18, 0
    %p113 = por %p111, %p112
    %s114 = ssub.s32 %s12, %s19
    %p115 = scmp.eq.s32.totalorder %s114, 0
    %s117 = sadd.s32 %s116, 1
    %s118 = scalar_select %p115, %s116, %s117
    %p121 = pneg %p115
    %p122 = scmp.eq.s32.totalorder %s12, 3
    %p123 = por %p121, %p122
    %p124 = scmp.ne.s32.totalorder %s116, %s119
    %p125 = scmp.eq.s32.totalorder %s12, 0
    %p126 = por %p124, %p125
    %p127 = scmp.ne.s32.totalorder %s116, %s119
    %p128 = scmp.eq.s32.totalorder %s17, 3
    %p129 = por %p127, %p128
    %p130 = scmp.ne.s32.totalorder %s119, %s120
    %p131 = scmp.eq.s32.totalorder %s17, 0
    %p132 = por %p130, %p131
    %p133 = scmp.ne.s32.totalorder %s119, %s120
    %p134 = scmp.eq.s32.totalorder %s18, 3
    %p135 = por %p133, %p134
    %p137 = scmp.ne.s32.totalorder %s120, %s136
    %p138 = scmp.eq.s32.totalorder %s18, 0
    %p139 = por %p137, %p138
    %s140 = ssub.s32 %s12, %s19
    %p141 = scmp.eq.s32.totalorder %s140, 0
    %s143 = sadd.s32 %s142, 1
    %s144 = scalar_select %p141, %s142, %s143
    %p147 = pneg %p141
    %p148 = scmp.eq.s32.totalorder %s12, 3
    %p149 = por %p147, %p148
    %p150 = scmp.ne.s32.totalorder %s142, %s145
    %p151 = scmp.eq.s32.totalorder %s12, 0
    %p152 = por %p150, %p151
    %p153 = scmp.ne.s32.totalorder %s142, %s145
    %p154 = scmp.eq.s32.totalorder %s17, 3
    %p155 = por %p153, %p154
    %p156 = scmp.ne.s32.totalorder %s145, %s146
    %p157 = scmp.eq.s32.totalorder %s17, 0
    %p158 = por %p156, %p157
    %p159 = scmp.ne.s32.totalorder %s145, %s146
    %p160 = scmp.eq.s32.totalorder %s18, 3
    %p161 = por %p159, %p160
    %p163 = scmp.ne.s32.totalorder %s146, %s162
    %p164 = scmp.eq.s32.totalorder %s18, 0
    %p165 = por %p163, %p164
    %p166 = scmp.le.s32.totalorder 1, %s12
    %p167 = scmp.lt.s32.totalorder %s12, 5
    %p168 = pnand %p166, %p167
    %p169 = pneg %p168
    // Predicated region
    $region9: #{residual_conv_block.3} parent=5 // pred_check
      _
    $region10: #{residual_conv_block.3} parent=5 // pred_check_branch
      %171 = sbr.rel (%p168) target = $region12
    $region11: #{residual_conv_block.3} parent=5 // pred_region
      %s172 = ssub.s32 %s12, 1
      // Predicated region
      $region13: #{residual_conv_block.3} parent=11 // pred_check
        %p173 = pneg %p59
      $region14: #{residual_conv_block.3} parent=11 // pred_check_branch
        %175 = sbr.rel (%p173) target = $region16
      $region15: #{residual_conv_block.3} parent=11 // pred_region
        _
      $region16: #{residual_conv_block.3} parent=11 // pred_fallthru
        _
      // Predicated region
      $region17: #{residual_conv_block.3} parent=11 // pred_check
        %p176 = pneg %p80
      $region18: #{residual_conv_block.3} parent=11 // pred_check_branch
        %178 = sbr.rel (%p176) target = $region20
      $region19: #{residual_conv_block.3} parent=11 // pred_region
        _
      $region20: #{residual_conv_block.3} parent=11 // pred_fallthru
        _
    $region12: #{residual_conv_block.3} parent=5 // pred_fallthru
      _
    %p179 = scmp.lt.s32.totalorder %s12, 4
    // Predicated region
    $region21: #{residual_conv_block.3} parent=5 // pred_check
      %p180 = pneg %p179
    $region22: #{residual_conv_block.3} parent=5 // pred_check_branch
      %182 = sbr.rel (%p180) target = $region24
    $region23: #{residual_conv_block.3} parent=5 // pred_region
      // Predicated region
      $region25: #{residual_conv_block.3} parent=23 // pred_check
        %p183 = pneg %p32
      $region26: #{residual_conv_block.3} parent=23 // pred_check_branch
        %185 = sbr.rel (%p183) target = $region28
      $region27: #{residual_conv_block.3} parent=23 // pred_region
        %p186 = scmp.lt.s32.totalorder %s12, 3
        %s187 = scalar_select %p186, %s12, 3
        %s188 = smul.addr %s187, 2
        %s189 = smul.addr %s188, 2
        %s190 = scalar_lea.vmem %s0, %s189
      $region28: #{residual_conv_block.3} parent=23 // pred_fallthru
        _
    $region24: #{residual_conv_block.3} parent=5 // pred_fallthru
      _
    %p191 = scmp.le.s32.totalorder 1, %s12
    %p192 = scmp.lt.s32.totalorder %s12, 5
    %p193 = pnand %p191, %p192
    %p194 = pneg %p193
    // Predicated region
    $region29: #{residual_conv_block.3} parent=5 // pred_check
      _
    $region30: #{residual_conv_block.3} parent=5 // pred_check_branch
      %196 = sbr.rel (%p193) target = $region32
    $region31: #{residual_conv_block.3} parent=5 // pred_region
      %s197 = ssub.s32 %s12, 1
      %p198 = scmp.lt.s32.totalorder %s17, 3
      %s199 = scalar_select %p198, %s17, 3
      %s200 = smul.addr %s199, 2
      %s201 = smul.addr %s200, 2
      %s202 = scalar_lea.vmem %s0, %s201
      %p203 = pneg %p38
      %p204 = pneg %p35
      %p205 = pneg %p59
      %p206 = pneg %p56
      %p207 = pneg %p80
      %p208 = pneg %p77
      %p209 = pneg %p106
      %p210 = pneg %p103
      %p211 = scmp.lt.s32.totalorder %s17, 3
      %s212 = scalar_select %p211, %s17, 3
      %s213 = smul.addr %s212, 2
      %s214 = smul.addr %s213, 2
      %s215 = scalar_lea.vmem %s3, %s214
      %p216 = pneg %p132
      %p217 = pneg %p129
      %p218 = scmp.lt.s32.totalorder %s17, 3
      %s219 = scalar_select %p218, %s17, 3
      %s220 = smul.addr %s219, 4
      %s221 = scalar_lea.vmem %s4, %s220
      %p222 = pneg %p158
      %p223 = pneg %p155
      %p224 = scmp.lt.s32.totalorder %s17, 3
      %s225 = scalar_select %p224, %s17, 3
      %s226 = smul.addr %s225, 4
      %s227 = scalar_lea.vmem %s5, %s226
      %p228 = scmp.lt.s32.totalorder %s17, 3
      %s229 = scalar_select %p228, %s17, 3
      %s230 = smul.addr %s229, 2
      %s231 = smul.addr %s230, 2
      %s232 = scalar_lea.vmem %s0, %s231
      %p233 = scmp.lt.s32.totalorder %s17, 3
      %s234 = scalar_select %p233, %s17, 3
      %s235 = smul.addr %s234, 2
      %s236 = smul.addr %s235, 2
      %s237 = scalar_lea.vmem %s3, %s236
      %p238 = scmp.lt.s32.totalorder %s17, 3
      %s239 = scalar_select %p238, %s17, 3
      %s240 = smul.addr %s239, 4
      %s241 = scalar_lea.vmem %s4, %s240
      %p242 = scmp.lt.s32.totalorder %s17, 3
      %s243 = scalar_select %p242, %s17, 3
      %s244 = smul.addr %s243, 4
      %s245 = scalar_lea.vmem %s5, %s244
      %v247 = vld [vmem:[%s232] sm:$0xf]
      %v248 = vld [vmem:[%s1] sm:$0x3]
      %s249 = scalar_lea.vmem %s1, 2
      %v250 = vld [vmem:[%s249] sm:$0x3]
      %v253 = vunpack.c.l.s4 1983009808
      %v254 = vunpack.c.0.s8 %v253
      %v255 = vlaneseq
      %v256 = vshrl.u32 %v255, 7
      %v257 = vsub.s32 %v254, %v256
      %v258 = vrot.slane %v247, %v257
      %v259 = vcombine.high %v258, %v258
      %260 = vrot.lane.b32.xlu0 %v258, 127
      %v261 = vpop.permute.xlu0 %260
      %262 = vrot.lane.b32.xlu0 %v259, 127
      %v263 = vpop.permute.xlu0 %262
      %vm264 = vcmask 1039360
      %v265 = vsel %vm264, %v261, %v263
      %vm266 = vcmask 31744
      %v268 = vsel %vm266, %v250, 0
      %vm270 = vcmask 1041408
      %v272 = vsel %vm270, %v265, 0
      %v275 = vsel %vm270, %v263, 0
      %277 = vmatprep.subr.bf16.mxu0 0
      %278 = vmatpush1.bf16.msra.mxu0 0
      %279 = vmatprep.subr.bf16.mxu0 0
      %280 = vmatpush1.bf16.msra.mxu0 0
      %281 = vmatprep.subr.bf16.mxu0 0
      %282 = vmatpush1.bf16.msra.mxu0 0
      %283 = vmatprep.subr.bf16.mxu0 0
      %284 = vmatpush1.bf16.msra.mxu0 0
      %285 = vmatprep.subr.bf16.mxu0 0
      %286 = vmatpush1.bf16.msra.mxu0 0
      %287 = vmatprep.subr.bf16.mxu0 0
      %288 = vmatpush1.bf16.msra.mxu0 0
      %289 = vmatprep.subr.bf16.mxu0 0
      %290 = vmatpush1.bf16.msra.mxu0 0
      %291 = vmatprep.subr.bf16.mxu0 %v275
      %292 = vmatpush1.bf16.msra.mxu0 %v272
      %293 = vmatprep.subr.bf16.mxu0 0
      %294 = vmatpush2.bf16.msra.mxu0 0
      %295 = vmatprep.subr.bf16.mxu0 0
      %296 = vmatpush2.bf16.msra.mxu0 0
      %297 = vmatprep.subr.bf16.mxu0 0
      %298 = vmatpush2.bf16.msra.mxu0 0
      %299 = vmatprep.subr.bf16.mxu0 0
      %300 = vmatpush2.bf16.msra.mxu0 0
      %301 = vmatprep.subr.bf16.mxu0 0
      %302 = vmatpush2.bf16.msra.mxu0 0
      %303 = vmatprep.subr.bf16.mxu0 0
      %304 = vmatpush2.bf16.msra.mxu0 0
      %305 = vmatprep.subr.bf16.mxu0 0
      %306 = vmatpush2.bf16.msra.mxu0 0
      %307 = vmatprep.subr.bf16.mxu0 0
      %308 = vmatpush2.bf16.msra.mxu0 0
      %309 = vmatprep.mubr.bf16.mxu0 0
      %310 = vmatmul.mubr.bf16.gmra.mxu0 %v268
      %v311 = vpop.f32.mrf.mxu0
      %v312 = vadd.f32 0.0, %v311
      %v313 = vpop.f32.mrf.mxu0
      %v314 = vadd.f32 0.0, %v313
      %v315 = vpop.f32.mrf.mxu0
      %v316 = vpop.f32.mrf.mxu0
      %317 = vdwg.mxu0
      %v319 = vsel %vm266, %v248, 0
      %v322 = vsel %vm270, %v258, 0
      %v325 = vsel %vm270, %v259, 0
      %327 = vmatprep.subr.bf16.mxu0 0
      %328 = vmatpush1.bf16.msra.mxu0 0
      %329 = vmatprep.subr.bf16.mxu0 0
      %330 = vmatpush1.bf16.msra.mxu0 0
      %331 = vmatprep.subr.bf16.mxu0 0
      %332 = vmatpush1.bf16.msra.mxu0 0
      %333 = vmatprep.subr.bf16.mxu0 0
      %334 = vmatpush1.bf16.msra.mxu0 0
      %335 = vmatprep.subr.bf16.mxu0 0
      %336 = vmatpush1.bf16.msra.mxu0 0
      %337 = vmatprep.subr.bf16.mxu0 0
      %338 = vmatpush1.bf16.msra.mxu0 0
      %339 = vmatprep.subr.bf16.mxu0 0
      %340 = vmatpush1.bf16.msra.mxu0 0
      %341 = vmatprep.subr.bf16.mxu0 %v325
      %342 = vmatpush1.bf16.msra.mxu0 %v322
      %343 = vmatprep.subr.bf16.mxu0 0
      %344 = vmatpush2.bf16.msra.mxu0 0
      %345 = vmatprep.subr.bf16.mxu0 0
      %346 = vmatpush2.bf16.msra.mxu0 0
      %347 = vmatprep.subr.bf16.mxu0 0
      %348 = vmatpush2.bf16.msra.mxu0 0
      %349 = vmatprep.subr.bf16.mxu0 0
      %350 = vmatpush2.bf16.msra.mxu0 0
      %351 = vmatprep.subr.bf16.mxu0 0
      %352 = vmatpush2.bf16.msra.mxu0 0
      %353 = vmatprep.subr.bf16.mxu0 0
      %354 = vmatpush2.bf16.msra.mxu0 0
      %355 = vmatprep.subr.bf16.mxu0 0
      %356 = vmatpush2.bf16.msra.mxu0 0
      %357 = vmatprep.subr.bf16.mxu0 0
      %358 = vmatpush2.bf16.msra.mxu0 0
      %359 = vmatprep.mubr.bf16.mxu0 0
      %360 = vmatmul.mubr.bf16.gmra.mxu0 %v319
      %v361 = vpop.f32.mrf.mxu0
      %v362 = vadd.f32 %v312, %v361
      %v363 = vpop.f32.mrf.mxu0
      %v364 = vadd.f32 %v314, %v363
      %v365 = vpop.f32.mrf.mxu0
      %v366 = vpop.f32.mrf.mxu0
      %367 = vdwg.mxu0
      %s368 = scalar_lea.vmem %s1, 4
      %v369 = vld [vmem:[%s368] sm:$0x3]
      %370 = vrot.lane.b32.xlu0 %v258, 126
      %v371 = vpop.permute.xlu0 %370
      %372 = vrot.lane.b32.xlu0 %v259, 126
      %v373 = vpop.permute.xlu0 %372
      %vm374 = vcmask 1031168
      %v375 = vsel %vm374, %v371, %v373
      %v377 = vsel %vm266, %v369, 0
      %v380 = vsel %vm270, %v375, 0
      %v383 = vsel %vm270, %v373, 0
      %385 = vmatprep.subr.bf16.mxu0 0
      %386 = vmatpush1.bf16.msra.mxu0 0
      %387 = vmatprep.subr.bf16.mxu0 0
      %388 = vmatpush1.bf16.msra.mxu0 0
      %389 = vmatprep.subr.bf16.mxu0 0
      %390 = vmatpush1.bf16.msra.mxu0 0
      %391 = vmatprep.subr.bf16.mxu0 0
      %392 = vmatpush1.bf16.msra.mxu0 0
      %393 = vmatprep.subr.bf16.mxu0 0
      %394 = vmatpush1.bf16.msra.mxu0 0
      %395 = vmatprep.subr.bf16.mxu0 0
      %396 = vmatpush1.bf16.msra.mxu0 0
      %397 = vmatprep.subr.bf16.mxu0 0
      %398 = vmatpush1.bf16.msra.mxu0 0
      %399 = vmatprep.subr.bf16.mxu0 %v383
      %400 = vmatpush1.bf16.msra.mxu0 %v380
      %401 = vmatprep.subr.bf16.mxu0 0
      %402 = vmatpush2.bf16.msra.mxu0 0
      %403 = vmatprep.subr.bf16.mxu0 0
      %404 = vmatpush2.bf16.msra.mxu0 0
      %405 = vmatprep.subr.bf16.mxu0 0
      %406 = vmatpush2.bf16.msra.mxu0 0
      %407 = vmatprep.subr.bf16.mxu0 0
      %408 = vmatpush2.bf16.msra.mxu0 0
      %409 = vmatprep.subr.bf16.mxu0 0
      %410 = vmatpush2.bf16.msra.mxu0 0
      %411 = vmatprep.subr.bf16.mxu0 0
      %412 = vmatpush2.bf16.msra.mxu0 0
      %413 = vmatprep.subr.bf16.mxu0 0
      %414 = vmatpush2.bf16.msra.mxu0 0
      %415 = vmatprep.subr.bf16.mxu0 0
      %416 = vmatpush2.bf16.msra.mxu0 0
      %417 = vmatprep.mubr.bf16.mxu0 0
      %418 = vmatmul.mubr.bf16.gmra.mxu0 %v377
      %v419 = vpop.f32.mrf.mxu0
      %v420 = vadd.f32 0.0, %v419
      %v421 = vpop.f32.mrf.mxu0
      %v422 = vadd.f32 0.0, %v421
      %v423 = vpop.f32.mrf.mxu0
      %v424 = vpop.f32.mrf.mxu0
      %425 = vdwg.mxu0
      %v426 = vadd.f32 %v362, %v420
      %v427 = vadd.f32 %v364, %v422
      %s428 = scalar_lea.vmem %s1, 6
      %v429 = vld [vmem:[%s428] sm:$0x3]
      %430 = vrot.lane.b32.xlu0 %v258, 110
      %v431 = vpop.permute.xlu0 %430
      %432 = vrot.lane.b32.xlu0 %v259, 110
      %v433 = vpop.permute.xlu0 %432
      %vm434 = vcmask 900096
      %v435 = vsel %vm434, %v431, %v433
      %v437 = vsel %vm266, %v429, 0
      %v440 = vsel %vm270, %v435, 0
      %v443 = vsel %vm270, %v433, 0
      %445 = vmatprep.subr.bf16.mxu0 0
      %446 = vmatpush1.bf16.msra.mxu0 0
      %447 = vmatprep.subr.bf16.mxu0 0
      %448 = vmatpush1.bf16.msra.mxu0 0
      %449 = vmatprep.subr.bf16.mxu0 0
      %450 = vmatpush1.bf16.msra.mxu0 0
      %451 = vmatprep.subr.bf16.mxu0 0
      %452 = vmatpush1.bf16.msra.mxu0 0
      %453 = vmatprep.subr.bf16.mxu0 0
      %454 = vmatpush1.bf16.msra.mxu0 0
      %455 = vmatprep.subr.bf16.mxu0 0
      %456 = vmatpush1.bf16.msra.mxu0 0
      %457 = vmatprep.subr.bf16.mxu0 0
      %458 = vmatpush1.bf16.msra.mxu0 0
      %459 = vmatprep.subr.bf16.mxu0 %v443
      %460 = vmatpush1.bf16.msra.mxu0 %v440
      %461 = vmatprep.subr.bf16.mxu0 0
      %462 = vmatpush2.bf16.msra.mxu0 0
      %463 = vmatprep.subr.bf16.mxu0 0
      %464 = vmatpush2.bf16.msra.mxu0 0
      %465 = vmatprep.subr.bf16.mxu0 0
      %466 = vmatpush2.bf16.msra.mxu0 0
      %467 = vmatprep.subr.bf16.mxu0 0
      %468 = vmatpush2.bf16.msra.mxu0 0
      %469 = vmatprep.subr.bf16.mxu0 0
      %470 = vmatpush2.bf16.msra.mxu0 0
      %471 = vmatprep.subr.bf16.mxu0 0
      %472 = vmatpush2.bf16.msra.mxu0 0
      %473 = vmatprep.subr.bf16.mxu0 0
      %474 = vmatpush2.bf16.msra.mxu0 0
      %475 = vmatprep.subr.bf16.mxu0 0
      %476 = vmatpush2.bf16.msra.mxu0 0
      %477 = vmatprep.mubr.bf16.mxu0 0
      %478 = vmatmul.mubr.bf16.gmra.mxu0 %v437
      %v479 = vpop.f32.mrf.mxu0
      %v480 = vadd.f32 0.0, %v479
      %v481 = vpop.f32.mrf.mxu0
      %v482 = vadd.f32 0.0, %v481
      %v483 = vpop.f32.mrf.mxu0
      %v484 = vpop.f32.mrf.mxu0
      %485 = vdwg.mxu0
      %v486 = vadd.f32 %v426, %v480
      %v487 = vadd.f32 %v427, %v482
      %s488 = scalar_lea.vmem %s1, 8
      %v489 = vld [vmem:[%s488] sm:$0x3]
      %490 = vrot.lane.b32.xlu0 %v258, 109
      %v491 = vpop.permute.xlu0 %490
      %492 = vrot.lane.b32.xlu0 %v259, 109
      %v493 = vpop.permute.xlu0 %492
      %vm494 = vcmask 891904
      %v495 = vsel %vm494, %v491, %v493
      %v497 = vsel %vm266, %v489, 0
      %v500 = vsel %vm270, %v495, 0
      %v503 = vsel %vm270, %v493, 0
      %505 = vmatprep.subr.bf16.mxu0 0
      %506 = vmatpush1.bf16.msra.mxu0 0
      %507 = vmatprep.subr.bf16.mxu0 0
      %508 = vmatpush1.bf16.msra.mxu0 0
      %509 = vmatprep.subr.bf16.mxu0 0
      %510 = vmatpush1.bf16.msra.mxu0 0
      %511 = vmatprep.subr.bf16.mxu0 0
      %512 = vmatpush1.bf16.msra.mxu0 0
      %513 = vmatprep.subr.bf16.mxu0 0
      %514 = vmatpush1.bf16.msra.mxu0 0
      %515 = vmatprep.subr.bf16.mxu0 0
      %516 = vmatpush1.bf16.msra.mxu0 0
      %517 = vmatprep.subr.bf16.mxu0 0
      %518 = vmatpush1.bf16.msra.mxu0 0
      %519 = vmatprep.subr.bf16.mxu0 %v503
      %520 = vmatpush1.bf16.msra.mxu0 %v500
      %521 = vmatprep.subr.bf16.mxu0 0
      %522 = vmatpush2.bf16.msra.mxu0 0
      %523 = vmatprep.subr.bf16.mxu0 0
      %524 = vmatpush2.bf16.msra.mxu0 0
      %525 = vmatprep.subr.bf16.mxu0 0
      %526 = vmatpush2.bf16.msra.mxu0 0
      %527 = vmatprep.subr.bf16.mxu0 0
      %528 = vmatpush2.bf16.msra.mxu0 0
      %529 = vmatprep.subr.bf16.mxu0 0
      %530 = vmatpush2.bf16.msra.mxu0 0
      %531 = vmatprep.subr.bf16.mxu0 0
      %532 = vmatpush2.bf16.msra.mxu0 0
      %533 = vmatprep.subr.bf16.mxu0 0
      %534 = vmatpush2.bf16.msra.mxu0 0
      %535 = vmatprep.subr.bf16.mxu0 0
      %536 = vmatpush2.bf16.msra.mxu0 0
      %537 = vmatprep.mubr.bf16.mxu0 0
      %538 = vmatmul.mubr.bf16.gmra.mxu0 %v497
      %v539 = vpop.f32.mrf.mxu0
      %v540 = vadd.f32 0.0, %v539
      %v541 = vpop.f32.mrf.mxu0
      %v542 = vadd.f32 0.0, %v541
      %v543 = vpop.f32.mrf.mxu0
      %v544 = vpop.f32.mrf.mxu0
      %545 = vdwg.mxu0
      %v546 = vadd.f32 %v486, %v540
      %v547 = vadd.f32 %v487, %v542
      %s548 = scalar_lea.vmem %s1, 10
      %v549 = vld [vmem:[%s548] sm:$0x3]
      %550 = vrot.lane.b32.xlu0 %v258, 108
      %v551 = vpop.permute.xlu0 %550
      %552 = vrot.lane.b32.xlu0 %v259, 108
      %v553 = vpop.permute.xlu0 %552
      %vm554 = vcmask 883712
      %v555 = vsel %vm554, %v551, %v553
      %v557 = vsel %vm266, %v549, 0
      %v560 = vsel %vm270, %v555, 0
      %v563 = vsel %vm270, %v553, 0
      %565 = vmatprep.subr.bf16.mxu0 0
      %566 = vmatpush1.bf16.msra.mxu0 0
      %567 = vmatprep.subr.bf16.mxu0 0
      %568 = vmatpush1.bf16.msra.mxu0 0
      %569 = vmatprep.subr.bf16.mxu0 0
      %570 = vmatpush1.bf16.msra.mxu0 0
      %571 = vmatprep.subr.bf16.mxu0 0
      %572 = vmatpush1.bf16.msra.mxu0 0
      %573 = vmatprep.subr.bf16.mxu0 0
      %574 = vmatpush1.bf16.msra.mxu0 0
      %575 = vmatprep.subr.bf16.mxu0 0
      %576 = vmatpush1.bf16.msra.mxu0 0
      %577 = vmatprep.subr.bf16.mxu0 0
      %578 = vmatpush1.bf16.msra.mxu0 0
      %579 = vmatprep.subr.bf16.mxu0 %v563
      %580 = vmatpush1.bf16.msra.mxu0 %v560
      %581 = vmatprep.subr.bf16.mxu0 0
      %582 = vmatpush2.bf16.msra.mxu0 0
      %583 = vmatprep.subr.bf16.mxu0 0
      %584 = vmatpush2.bf16.msra.mxu0 0
      %585 = vmatprep.subr.bf16.mxu0 0
      %586 = vmatpush2.bf16.msra.mxu0 0
      %587 = vmatprep.subr.bf16.mxu0 0
      %588 = vmatpush2.bf16.msra.mxu0 0
      %589 = vmatprep.subr.bf16.mxu0 0
      %590 = vmatpush2.bf16.msra.mxu0 0
      %591 = vmatprep.subr.bf16.mxu0 0
      %592 = vmatpush2.bf16.msra.mxu0 0
      %593 = vmatprep.subr.bf16.mxu0 0
      %594 = vmatpush2.bf16.msra.mxu0 0
      %595 = vmatprep.subr.bf16.mxu0 0
      %596 = vmatpush2.bf16.msra.mxu0 0
      %597 = vmatprep.mubr.bf16.mxu0 0
      %598 = vmatmul.mubr.bf16.gmra.mxu0 %v557
      %v599 = vpop.f32.mrf.mxu0
      %v600 = vadd.f32 0.0, %v599
      %v601 = vpop.f32.mrf.mxu0
      %v602 = vadd.f32 0.0, %v601
      %v603 = vpop.f32.mrf.mxu0
      %v604 = vpop.f32.mrf.mxu0
      %605 = vdwg.mxu0
      %v606 = vadd.f32 %v546, %v600
      %v607 = vadd.f32 %v547, %v602
      %s608 = scalar_lea.vmem %s1, 12
      %v609 = vld [vmem:[%s608] sm:$0x3]
      %610 = vrot.lane.b32.xlu0 %v258, 92
      %v611 = vpop.permute.xlu0 %610
      %612 = vrot.lane.b32.xlu0 %v259, 92
      %v613 = vpop.permute.xlu0 %612
      %vm614 = vcmask 752640
      %v615 = vsel %vm614, %v611, %v613
      %v617 = vsel %vm266, %v609, 0
      %v620 = vsel %vm270, %v615, 0
      %v623 = vsel %vm270, %v613, 0
      %625 = vmatprep.subr.bf16.mxu0 0
      %626 = vmatpush1.bf16.msra.mxu0 0
      %627 = vmatprep.subr.bf16.mxu0 0
      %628 = vmatpush1.bf16.msra.mxu0 0
      %629 = vmatprep.subr.bf16.mxu0 0
      %630 = vmatpush1.bf16.msra.mxu0 0
      %631 = vmatprep.subr.bf16.mxu0 0
      %632 = vmatpush1.bf16.msra.mxu0 0
      %633 = vmatprep.subr.bf16.mxu0 0
      %634 = vmatpush1.bf16.msra.mxu0 0
      %635 = vmatprep.subr.bf16.mxu0 0
      %636 = vmatpush1.bf16.msra.mxu0 0
      %637 = vmatprep.subr.bf16.mxu0 0
      %638 = vmatpush1.bf16.msra.mxu0 0
      %639 = vmatprep.subr.bf16.mxu0 %v623
      %640 = vmatpush1.bf16.msra.mxu0 %v620
      %641 = vmatprep.subr.bf16.mxu0 0
      %642 = vmatpush2.bf16.msra.mxu0 0
      %643 = vmatprep.subr.bf16.mxu0 0
      %644 = vmatpush2.bf16.msra.mxu0 0
      %645 = vmatprep.subr.bf16.mxu0 0
      %646 = vmatpush2.bf16.msra.mxu0 0
      %647 = vmatprep.subr.bf16.mxu0 0
      %648 = vmatpush2.bf16.msra.mxu0 0
      %649 = vmatprep.subr.bf16.mxu0 0
      %650 = vmatpush2.bf16.msra.mxu0 0
      %651 = vmatprep.subr.bf16.mxu0 0
      %652 = vmatpush2.bf16.msra.mxu0 0
      %653 = vmatprep.subr.bf16.mxu0 0
      %654 = vmatpush2.bf16.msra.mxu0 0
      %655 = vmatprep.subr.bf16.mxu0 0
      %656 = vmatpush2.bf16.msra.mxu0 0
      %657 = vmatprep.mubr.bf16.mxu0 0
      %658 = vmatmul.mubr.bf16.gmra.mxu0 %v617
      %v659 = vpop.f32.mrf.mxu0
      %v660 = vadd.f32 0.0, %v659
      %v661 = vpop.f32.mrf.mxu0
      %v662 = vadd.f32 0.0, %v661
      %v663 = vpop.f32.mrf.mxu0
      %v664 = vpop.f32.mrf.mxu0
      %665 = vdwg.mxu0
      %v666 = vadd.f32 %v606, %v660
      %v667 = vadd.f32 %v607, %v662
      %s668 = scalar_lea.vmem %s1, 14
      %v669 = vld [vmem:[%s668] sm:$0x3]
      %670 = vrot.lane.b32.xlu0 %v258, 91
      %v671 = vpop.permute.xlu0 %670
      %672 = vrot.lane.b32.xlu0 %v259, 91
      %v673 = vpop.permute.xlu0 %672
      %vm674 = vcmask 744448
      %v675 = vsel %vm674, %v671, %v673
      %v677 = vsel %vm266, %v669, 0
      %v680 = vsel %vm270, %v675, 0
      %v683 = vsel %vm270, %v673, 0
      %685 = vmatprep.subr.bf16.mxu0 0
      %686 = vmatpush1.bf16.msra.mxu0 0
      %687 = vmatprep.subr.bf16.mxu0 0
      %688 = vmatpush1.bf16.msra.mxu0 0
      %689 = vmatprep.subr.bf16.mxu0 0
      %690 = vmatpush1.bf16.msra.mxu0 0
      %691 = vmatprep.subr.bf16.mxu0 0
      %692 = vmatpush1.bf16.msra.mxu0 0
      %693 = vmatprep.subr.bf16.mxu0 0
      %694 = vmatpush1.bf16.msra.mxu0 0
      %695 = vmatprep.subr.bf16.mxu0 0
      %696 = vmatpush1.bf16.msra.mxu0 0
      %697 = vmatprep.subr.bf16.mxu0 0
      %698 = vmatpush1.bf16.msra.mxu0 0
      %699 = vmatprep.subr.bf16.mxu0 %v683
      %700 = vmatpush1.bf16.msra.mxu0 %v680
      %701 = vmatprep.subr.bf16.mxu0 0
      %702 = vmatpush2.bf16.msra.mxu0 0
      %703 = vmatprep.subr.bf16.mxu0 0
      %704 = vmatpush2.bf16.msra.mxu0 0
      %705 = vmatprep.subr.bf16.mxu0 0
      %706 = vmatpush2.bf16.msra.mxu0 0
      %707 = vmatprep.subr.bf16.mxu0 0
      %708 = vmatpush2.bf16.msra.mxu0 0
      %709 = vmatprep.subr.bf16.mxu0 0
      %710 = vmatpush2.bf16.msra.mxu0 0
      %711 = vmatprep.subr.bf16.mxu0 0
      %712 = vmatpush2.bf16.msra.mxu0 0
      %713 = vmatprep.subr.bf16.mxu0 0
      %714 = vmatpush2.bf16.msra.mxu0 0
      %715 = vmatprep.subr.bf16.mxu0 0
      %716 = vmatpush2.bf16.msra.mxu0 0
      %717 = vmatprep.mubr.bf16.mxu0 0
      %718 = vmatmul.mubr.bf16.gmra.mxu0 %v677
      %v719 = vpop.f32.mrf.mxu0
      %v720 = vadd.f32 0.0, %v719
      %v721 = vpop.f32.mrf.mxu0
      %v722 = vadd.f32 0.0, %v721
      %v723 = vpop.f32.mrf.mxu0
      %v724 = vpop.f32.mrf.mxu0
      %725 = vdwg.mxu0
      %v726 = vadd.f32 %v666, %v720
      %v727 = vadd.f32 %v667, %v722
      %s728 = scalar_lea.vmem %s1, 16
      %v729 = vld [vmem:[%s728] sm:$0x3]
      %730 = vrot.lane.b32.xlu0 %v258, 90
      %v731 = vpop.permute.xlu0 %730
      %732 = vrot.lane.b32.xlu0 %v259, 90
      %v733 = vpop.permute.xlu0 %732
      %vm734 = vcmask 736256
      %v735 = vsel %vm734, %v731, %v733
      %v737 = vsel %vm266, %v729, 0
      %v740 = vsel %vm270, %v735, 0
      %v743 = vsel %vm270, %v733, 0
      %745 = vmatprep.subr.bf16.mxu0 0
      %746 = vmatpush1.bf16.msra.mxu0 0
      %747 = vmatprep.subr.bf16.mxu0 0
      %748 = vmatpush1.bf16.msra.mxu0 0
      %749 = vmatprep.subr.bf16.mxu0 0
      %750 = vmatpush1.bf16.msra.mxu0 0
      %751 = vmatprep.subr.bf16.mxu0 0
      %752 = vmatpush1.bf16.msra.mxu0 0
      %753 = vmatprep.subr.bf16.mxu0 0
      %754 = vmatpush1.bf16.msra.mxu0 0
      %755 = vmatprep.subr.bf16.mxu0 0
      %756 = vmatpush1.bf16.msra.mxu0 0
      %757 = vmatprep.subr.bf16.mxu0 0
      %758 = vmatpush1.bf16.msra.mxu0 0
      %759 = vmatprep.subr.bf16.mxu0 %v743
      %760 = vmatpush1.bf16.msra.mxu0 %v740
      %761 = vmatprep.subr.bf16.mxu0 0
      %762 = vmatpush2.bf16.msra.mxu0 0
      %763 = vmatprep.subr.bf16.mxu0 0
      %764 = vmatpush2.bf16.msra.mxu0 0
      %765 = vmatprep.subr.bf16.mxu0 0
      %766 = vmatpush2.bf16.msra.mxu0 0
      %767 = vmatprep.subr.bf16.mxu0 0
      %768 = vmatpush2.bf16.msra.mxu0 0
      %769 = vmatprep.subr.bf16.mxu0 0
      %770 = vmatpush2.bf16.msra.mxu0 0
      %771 = vmatprep.subr.bf16.mxu0 0
      %772 = vmatpush2.bf16.msra.mxu0 0
      %773 = vmatprep.subr.bf16.mxu0 0
      %774 = vmatpush2.bf16.msra.mxu0 0
      %775 = vmatprep.subr.bf16.mxu0 0
      %776 = vmatpush2.bf16.msra.mxu0 0
      %777 = vmatprep.mubr.bf16.mxu0 0
      %778 = vmatmul.mubr.bf16.gmra.mxu0 %v737
      %v779 = vpop.f32.mrf.mxu0
      %v780 = vadd.f32 0.0, %v779
      %v781 = vpop.f32.mrf.mxu0
      %v782 = vadd.f32 0.0, %v781
      %v783 = vpop.f32.mrf.mxu0
      %v784 = vpop.f32.mrf.mxu0
      %785 = vdwg.mxu0
      %v786 = vadd.f32 %v726, %v780
      %v787 = vadd.f32 %v727, %v782
      %v788 = vld [vmem:[%s2] sm:$0x3]
      %v790 = vlaneseq
      %v791 = vshrl.u32 %v790, 7
      %v792 = vsub.s32 0, %v791
      %v793 = vrot.slane %v788, %v792
      %v794 = vlaneseq
      %v795 = vshrl.u32 %v794, 7
      %v796 = vsub.s32 1, %v795
      %v797 = vrot.slane %v788, %v796
      %v800 = vmul.f32 %v786, %v793
      %v801 = vmul.f32 %v787, %v797
      %v802 = vpack.c.bf16 %v800, %v800
      %v803 = vpack.c.bf16 %v801, %v801
      %v806 = vcombine.low %v802, %v803
      %v808 = vunpack.c.l.s4 1983009808
      %v809 = vunpack.c.0.s8 %v808
      %v810 = vlaneseq
      %v811 = vshrl.u32 %v810, 7
      %v812 = vsub.s32 %v809, %v811
      %v813 = vrot.slane %v806, %v812
      %vm815 = vcmask 125954
      %vm816 = vmor %vm815, %vm270
      %817 = vst.msk [vmem:[%s237] sm:$0xf] %vm816, %v813
      %vm818 = vcmask 1043456
      %v819 = vsel %vm818, %v800, 0.0
      %vm820 = vcmask 125952
      %v821 = vsel %vm820, %v801, 0.0
      %v822 = vadd.f32 %v819, %v821
      %823 = vadd.xlane.f32.xlu0 %v822
      %v824 = vpop.xlane.xlu0 %823
      %vm825 = vcmask 3072
      %826 = vst.msk [vmem:[%s241] sm:$0xf] %vm825, %v824
      %v827 = vmul.f32 %v800, %v800
      %v828 = vmul.f32 %v801, %v801
      %v829 = vsel %vm818, %v827, 0.0
      %v830 = vsel %vm820, %v828, 0.0
      %v831 = vadd.f32 %v829, %v830
      %832 = vadd.xlane.f32.xlu0 %v831
      %v833 = vpop.xlane.xlu0 %832
      %834 = vst.msk [vmem:[%s245] sm:$0xf] %vm825, %v833
      %p835 = scmp.lt.s32.totalorder %s17, 3
      %s836 = scalar_select %p835, %s17, 3
      %s837 = smul.addr %s836, 2
      %s838 = smul.addr %s837, 2
      %s839 = scalar_lea.vmem %s3, %s838
      %p840 = scmp.lt.s32.totalorder %s17, 3
      %s841 = scalar_select %p840, %s17, 3
      %s842 = smul.addr %s841, 4
      %s843 = scalar_lea.vmem %s4, %s842
      %p844 = scmp.lt.s32.totalorder %s17, 3
      %s845 = scalar_select %p844, %s17, 3
      %s846 = smul.addr %s845, 4
      %s847 = scalar_lea.vmem %s5, %s846
      // Predicated region
      $region33: #{residual_conv_block.3} parent=31 // pred_check
        %p848 = pneg %p103
      $region34: #{residual_conv_block.3} parent=31 // pred_check_branch
        %850 = sbr.rel (%p848) target = $region36
      $region35: #{residual_conv_block.3} parent=31 // pred_region
        _
      $region36: #{residual_conv_block.3} parent=31 // pred_fallthru
        _
      // Predicated region
      $region37: #{residual_conv_block.3} parent=31 // pred_check
        %p851 = pneg %p129
      $region38: #{residual_conv_block.3} parent=31 // pred_check_branch
        %853 = sbr.rel (%p851) target = $region40
      $region39: #{residual_conv_block.3} parent=31 // pred_region
        _
      $region40: #{residual_conv_block.3} parent=31 // pred_fallthru
        _
      // Predicated region
      $region41: #{residual_conv_block.3} parent=31 // pred_check
        %p854 = pneg %p155
      $region42: #{residual_conv_block.3} parent=31 // pred_check_branch
        %856 = sbr.rel (%p854) target = $region44
      $region43: #{residual_conv_block.3} parent=31 // pred_region
        _
      $region44: #{residual_conv_block.3} parent=31 // pred_fallthru
        _
    $region32: #{residual_conv_block.3} parent=5 // pred_fallthru
      _
    %p857 = scmp.le.s32.totalorder 2, %s12
    // Predicated region
    $region45: #{residual_conv_block.3} parent=5 // pred_check
      %p858 = pneg %p857
    $region46: #{residual_conv_block.3} parent=5 // pred_check_branch
      %860 = sbr.rel (%p858) target = $region48
    $region47: #{residual_conv_block.3} parent=5 // pred_region
      %s861 = ssub.s32 %s12, 2
      // Predicated region
      $region49: #{residual_conv_block.3} parent=47 // pred_check
        %p862 = pneg %p109
      $region50: #{residual_conv_block.3} parent=47 // pred_check_branch
        %864 = sbr.rel (%p862) target = $region52
      $region51: #{residual_conv_block.3} parent=47 // pred_region
        %p865 = scmp.lt.s32.totalorder %s18, 3
        %s866 = scalar_select %p865, %s18, 3
        %s867 = smul.addr %s866, 2
        %s868 = smul.addr %s867, 2
        %s869 = scalar_lea.vmem %s3, %s868
      $region52: #{residual_conv_block.3} parent=47 // pred_fallthru
        _
      // Predicated region
      $region53: #{residual_conv_block.3} parent=47 // pred_check
        %p870 = pneg %p135
      $region54: #{residual_conv_block.3} parent=47 // pred_check_branch
        %872 = sbr.rel (%p870) target = $region56
      $region55: #{residual_conv_block.3} parent=47 // pred_region
        %p873 = scmp.lt.s32.totalorder %s18, 3
        %s874 = scalar_select %p873, %s18, 3
        %s875 = smul.addr %s874, 4
        %s876 = scalar_lea.vmem %s4, %s875
      $region56: #{residual_conv_block.3} parent=47 // pred_fallthru
        _
      // Predicated region
      $region57: #{residual_conv_block.3} parent=47 // pred_check
        %p877 = pneg %p161
      $region58: #{residual_conv_block.3} parent=47 // pred_check_branch
        %879 = sbr.rel (%p877) target = $region60
      $region59: #{residual_conv_block.3} parent=47 // pred_region
        %p880 = scmp.lt.s32.totalorder %s18, 3
        %s881 = scalar_select %p880, %s18, 3
        %s882 = smul.addr %s881, 4
        %s883 = scalar_lea.vmem %s5, %s882
      $region60: #{residual_conv_block.3} parent=47 // pred_fallthru
        _
    $region48: #{residual_conv_block.3} parent=5 // pred_fallthru
      _
  $region6: #{residual_conv_block.3} parent=0 // loop_footer
    %s16 = sadd.s32 1, %s12
  $region7: #{residual_conv_block.3} parent=0 // loop_footer_branch
    %11 = sbr.rel target = $region3
  $region8: #{residual_conv_block.3} parent=0 // loop_exit
    _

</llo_original>
